<compile_context>
chip_gen: v7x
topology: tpu7x:2x2x1
jax: 0.10.0
libtpu: 0.0.40
codegen_flags: <defaults>
</compile_context>

<pallas_src>
import functools

import jax
import jax.numpy as jnp
from jax import lax
from jax.experimental import pallas as pl
from jax.experimental.pallas import tpu as pltpu


# ----------------------------------------------------------------------------
# Fused kernel: one program per block of `Bb` batch elements.
#   x_ref     : (Bb, T, C)   activations
#   wqkv_ref  : (C, 3C)      [Q*scale | K | V] weights, head-major lanes
#   wproj_ref : (C, C)       W_proj^T
#   b_ref     : (1, C)       projection bias (float32)
#   o_ref     : (Bb, T, C)   output (lane-dense last dim C)
# ----------------------------------------------------------------------------
def _mha_fused_kernel(x_ref, wqkv_ref, wproj_ref, b_ref, o_ref, *,
                      num_heads, head_size, kv_block):
    Bb, T, C = x_ref.shape
    H, D = num_heads, head_size
    Tk = kv_block
    nkv = T // Tk
    compute_dtype = wqkv_ref.dtype

    # ---- fused QKV projection: one (Bb*T, C) @ (C, 3C) MXU op, f32 accum ----
    x = x_ref[...].reshape(Bb * T, C).astype(compute_dtype)
    qkv = jnp.dot(x, wqkv_ref[...], preferred_element_type=jnp.float32)
    qkv = qkv.astype(compute_dtype).reshape(Bb, T, 3 * C)     # single cast

    # ---- causal masks per KV block, hoisted out of the head loop ----
    row = lax.broadcasted_iota(jnp.int32, (T, Tk), 0)
    col = lax.broadcasted_iota(jnp.int32, (T, Tk), 1)
    masks = [(col + j * Tk) <= row for j in range(nkv)]
    neg_big = jnp.float32(-1e30)     # finite: NaN-safe, exp underflows to 0

    wp = wproj_ref[...]                                        # (C, C)

    # ---- per-head flash attention (online softmax over KV blocks) ----
    # NOTE: score tile already carries the module's n_embed**-0.5 scale
    # (folded into the Q weights at pack time).
    head_outs = []
    for h in range(H):                                         # H small; unrolled
        q = qkv[:, :, h * D:(h + 1) * D]                       # (Bb, T, D)
        k = qkv[:, :, C + h * D:C + (h + 1) * D]
        v = qkv[:, :, 2 * C + h * D:2 * C + (h + 1) * D]

        m = jnp.full((Bb, T, 1), neg_big, jnp.float32)
        l = jnp.zeros((Bb, T, 1), jnp.float32)
        acc = jnp.zeros((Bb, T, D), jnp.float32)

        # Static KV-block loop (trip count = T // kv_block); keeps the live
        # score tile at (Bb, T, Tk) instead of (Bb, T, T).
        for j in range(nkv):
            k_j = k[:, j * Tk:(j + 1) * Tk, :]                 # (Bb, Tk, D)
            v_j = v[:, j * Tk:(j + 1) * Tk, :]
            s = jnp.einsum('bqd,bkd->bqk', q, k_j,
                           preferred_element_type=jnp.float32)  # (Bb, T, Tk)
            s = jnp.where(masks[j][None], s, neg_big)

            m_new = jnp.maximum(m, jnp.max(s, axis=-1, keepdims=True))
            a = jnp.exp(m - m_new)                              # f32 (v5e-safe)
            p = jnp.exp(s - m_new)
            l = a * l + jnp.sum(p, axis=-1, keepdims=True)
            acc = a * acc + jnp.einsum('bqk,bkd->bqd',
                                       p.astype(compute_dtype), v_j,
                                       preferred_element_type=jnp.float32)
            m = m_new

        # EUP reciprocal (free slot) instead of a full-tile VALU divide.
        o_h = acc * pl.reciprocal(l, approx=True)               # (Bb, T, D) f32
        head_outs.append(o_h.astype(compute_dtype))

    # ---- concat heads along lanes, ONE projection matmul with K=C ----
    cat = jnp.concatenate(head_outs, axis=-1).reshape(Bb * T, C)
    out = jnp.dot(cat, wp, preferred_element_type=jnp.float32)  # (Bb*T, C)
    out = out + b_ref[...].astype(jnp.float32)                  # bias broadcast
    o_ref[...] = out.reshape(Bb, T, C).astype(o_ref.dtype)


# ----------------------------------------------------------------------------
# One-time parameter packing (init-time; NOT inside the per-call wrapper).
# ----------------------------------------------------------------------------
def pack_params(wq, wk, wv, w_proj_t, b_proj, *, scale,
                compute_dtype=jnp.bfloat16):
    """wq/wk/wv: (H, C, D); w_proj_t: (C, C); b_proj: (..., C).

    Returns (w_qkv (C,3C), w_proj (C,C), bias (1,C)); `scale` is folded into
    the Q columns so the kernel never multiplies the score tiles.
    """
    H, C, D = wq.shape

    def _flat(w):                                   # (H, C, D) -> (C, H*D)
        return jnp.transpose(w, (1, 0, 2)).reshape(C, H * D)

    w_qkv = jnp.concatenate([_flat(wq) * jnp.float32(scale),
                             _flat(wk), _flat(wv)],
                            axis=1).astype(compute_dtype)        # (C, 3C)
    w_proj = w_proj_t.astype(compute_dtype)                      # (C, C)
    b = jnp.asarray(b_proj, jnp.float32).reshape(1, C)
    return w_qkv, w_proj, b


def _pick_batch_block(B, T, target_rows=128):
    """Pack enough batch elements per grid step to fill ~target_rows MXU rows."""
    bb = max(1, min(B, target_rows // max(T, 1)))
    while B % bb:
        bb -= 1
    return max(bb, 1)


def multihead_forward(x, w_qkv, w_proj, b, *, num_heads, head_size,
                      kv_block=None, batch_block=None):
    """x: (B, T, C); packed params from `pack_params` (compute dtype = w_qkv.dtype)."""
    B, T, C = x.shape
    assert num_heads * head_size == C
    assert w_qkv.shape == (C, 3 * C) and w_proj.shape == (C, C)

    if kv_block is None:
        kv_block = min(T, 512)
    if T % kv_block:
        kv_block = T                     # fall back to a single KV block
    if batch_block is None:
        batch_block = _pick_batch_block(B, T)
    Bb = batch_block

    kernel = functools.partial(_mha_fused_kernel, num_heads=num_heads,
                               head_size=head_size, kv_block=kv_block)

    rows = B * T
    flops = int(2 * rows * C * 3 * C                 # fused QKV projection
                + B * num_heads * 2 * (2 * T * T * head_size)  # q@k^T, p@v
                + 2 * rows * C * C)                  # output projection
    transcendentals = int(B * num_heads * (T * T + 2 * T))
    bytes_accessed = int(x.size * x.dtype.itemsize
                         + w_qkv.size * w_qkv.dtype.itemsize
                         + w_proj.size * w_proj.dtype.itemsize
                         + b.size * 4
                         + rows * C * x.dtype.itemsize)

    return pl.pallas_call(
        kernel,
        out_shape=jax.ShapeDtypeStruct((B, T, C), x.dtype),
        grid_spec=pltpu.PrefetchScalarGridSpec(
            num_scalar_prefetch=0,
            grid=(B // Bb,),
            in_specs=[
                pl.BlockSpec((Bb, T, C), lambda i: (i, 0, 0)),
                # Weight blocks have constant index maps (fetched once).  For
                # large C, add pipeline_mode=pl.Buffered(1) here to halve the
                # weight VMEM footprint (extra headroom on v7x's 64 MiB).
                pl.BlockSpec((C, 3 * C), lambda i: (0, 0)),
                pl.BlockSpec((C, C), lambda i: (0, 0)),
                pl.BlockSpec((1, C), lambda i: (0, 0)),
            ],
            out_specs=pl.BlockSpec((Bb, T, C), lambda i: (i, 0, 0)),
        ),
        compiler_params=pltpu.CompilerParams(
            dimension_semantics=("parallel",),
            # Explicit budget (v7x: 64 MiB physical / 32 MiB default scoped).
            # Per-step live data here is tiny; set explicitly so oversized
            # configs fail loudly at compile time instead of silently spilling.
            vmem_limit_bytes=48 * 1024 * 1024,
        ),
        cost_estimate=pl.CostEstimate(flops=flops,
                                      transcendentals=transcendentals,
                                      bytes_accessed=bytes_accessed),
    )(x, w_qkv, w_proj, b)


# ----------------------------------------------------------------------------
# Pure-JAX reference matching the PyTorch module.
# ----------------------------------------------------------------------------
def _reference(x, wk, wq, wv, w_proj_t, b_proj):
    B, T, C = x.shape
    H, _, D = wk.shape
    scale = float(C) ** (-0.5)        # module uses n_embed**-0.5
    mask = jnp.tril(jnp.ones((T, T), dtype=bool))
    outs = []
    for h in range(H):
        k = x @ wk[h]
        q = x @ wq[h]
        v = x @ wv[h]
        wei = (q @ jnp.swapaxes(k, -2, -1)) * scale
        wei = jnp.where(mask, wei, -jnp.inf)
        wei = jax.nn.softmax(wei, axis=-1)
        outs.append(wei @ v)
    cat = jnp.concatenate(outs, axis=-1)
    return cat @ w_proj_t + b_proj


if __name__ == "__main__":
    # Small shapes consistent with the module: n_embed=32, 4 heads of size 8.
    B, T = 2, 8
    n_embed = 32
    num_heads = 4
    head_size = n_embed // num_heads
    scale = float(n_embed) ** (-0.5)

    key = jax.random.PRNGKey(0)
    k_x, k_k, k_q, k_v, k_p, k_b, k_x2 = jax.random.split(key, 7)

    x = jax.random.normal(k_x, (B, T, n_embed), dtype=jnp.float32)

    # PyTorch Linear weight is (out, in); we store the transpose so x @ W works.
    wk = jax.random.normal(k_k, (num_heads, n_embed, head_size), jnp.float32) * 0.1
    wq = jax.random.normal(k_q, (num_heads, n_embed, head_size), jnp.float32) * 0.1
    wv = jax.random.normal(k_v, (num_heads, n_embed, head_size), jnp.float32) * 0.1
    w_proj_t = jax.random.normal(k_p, (n_embed, n_embed), jnp.float32) * 0.1
    b_proj = jax.random.normal(k_b, (1, n_embed), jnp.float32) * 0.1

    ref = _reference(x, wk, wq, wv, w_proj_t, b_proj)

    # One-time packing (init-time), once per compute dtype.
    packed_f32 = pack_params(wq, wk, wv, w_proj_t, b_proj, scale=scale,
                             compute_dtype=jnp.float32)
    packed_bf16 = pack_params(wq, wk, wv, w_proj_t, b_proj, scale=scale,
                              compute_dtype=jnp.bfloat16)

    # 1) float32 MXU operands: tight semantic check.
    out_f32 = multihead_forward(x, *packed_f32, num_heads=num_heads,
                                head_size=head_size)
    out_f32 = jax.block_until_ready(out_f32)
    assert out_f32.shape == (B, T, n_embed)
    assert jnp.allclose(out_f32, ref, atol=1e-2, rtol=1e-2)

    # 2) bfloat16 MXU operands (perf default for v6e/v7x), f32 accumulation.
    out_bf16 = multihead_forward(x, *packed_bf16, num_heads=num_heads,
                                 head_size=head_size)
    out_bf16 = jax.block_until_ready(out_bf16)
    assert out_bf16.shape == (B, T, n_embed)
    assert jnp.allclose(out_bf16, ref, atol=5e-2, rtol=5e-2)

    # 3) Exercise the multi-KV-block online-softmax (flash) path: T=16, Tk=8.
    T2 = 16
    x2 = jax.random.normal(k_x2, (B, T2, n_embed), dtype=jnp.float32)
    ref2 = _reference(x2, wk, wq, wv, w_proj_t, b_proj)
    out2 = multihead_forward(x2, *packed_f32, num_heads=num_heads,
                             head_size=head_size, kv_block=8)
    out2 = jax.block_until_ready(out2)
    assert out2.shape == (B, T2, n_embed)
    assert jnp.allclose(out2, ref2, atol=1e-2, rtol=1e-2)

    print("KERNEL_OK")
</pallas_src>

<mosaic_0001>
module attributes {stable_mosaic.version = 11 : i64} {
  func.func @_mha_fused_kernel(%arg0: i32, %arg1: memref<2x8x32xf32, #tpu.memory_space<vmem>>, %arg2: memref<32x96xf32, #tpu.memory_space<vmem>>, %arg3: memref<32x32xf32, #tpu.memory_space<vmem>>, %arg4: memref<1x32xf32, #tpu.memory_space<vmem>>, %arg5: memref<2x8x32xf32, #tpu.memory_space<vmem>>) attributes {dimension_semantics = [#tpu.dimension_semantics<parallel>], iteration_bounds = array<i64: 1>, scalar_prefetch = 0 : i64, scratch_operands = 0 : i64, tpu.core_type = #tpu.core_type<tc>, window_params = [{transform_indices = @transform_0, window_bounds = array<i64: 2, 8, 32>}, {pipeline_mode = #tpu.pipeline_mode<synchronous>, transform_indices = @transform_1, window_bounds = array<i64: 32, 96>}, {pipeline_mode = #tpu.pipeline_mode<synchronous>, transform_indices = @transform_2, window_bounds = array<i64: 32, 32>}, {pipeline_mode = #tpu.pipeline_mode<synchronous>, transform_indices = @transform_3, window_bounds = array<i64: 1, 32>}, {transform_indices = @transform_4, window_bounds = array<i64: 2, 8, 32>}]} {
    %c0 = arith.constant 0 : index
    %c0_0 = arith.constant 0 : index
    %c0_1 = arith.constant 0 : index
    %0 = vector.load %arg1[%c0, %c0_0, %c0_1] : memref<2x8x32xf32, #tpu.memory_space<vmem>>, vector<2x8x32xf32>
    %1 = vector.shape_cast %0 : vector<2x8x32xf32> to vector<16x32xf32>
    %c0_2 = arith.constant 0 : index
    %c0_3 = arith.constant 0 : index
    %2 = vector.load %arg2[%c0_2, %c0_3] : memref<32x96xf32, #tpu.memory_space<vmem>>, vector<32x96xf32>
    %cst = arith.constant dense<0.000000e+00> : vector<16x96xf32>
    %3 = tpu.matmul %1, %2, %cst {dimension_numbers = #tpu.dot_dimension_numbers<[1], [0], [0], [1], [0, 0, 1, 1], [], []>} : vector<16x32xf32>, vector<32x96xf32>, vector<16x96xf32> -> vector<16x96xf32>
    %4 = vector.shape_cast %3 : vector<16x96xf32> to vector<2x8x96xf32>
    %5 = tpu.iota {dimensions = array<i32: 0>} : vector<8x8xi32>
    %6 = tpu.iota {dimensions = array<i32: 1>} : vector<8x8xi32>
    %c0_i32 = arith.constant 0 : i32
    %7 = vector.broadcast %c0_i32 : i32 to vector<8x8xi32>
    %8 = arith.addi %6, %7 : vector<8x8xi32>
    %9 = arith.cmpi sle, %8, %5 : vector<8x8xi32>
    %c0_4 = arith.constant 0 : index
    %c0_5 = arith.constant 0 : index
    %10 = vector.load %arg3[%c0_4, %c0_5] : memref<32x32xf32, #tpu.memory_space<vmem>>, vector<32x32xf32>
    %11 = vector.extract_strided_slice %4 {offsets = [0, 0, 0], sizes = [2, 8, 8], strides = [1, 1, 1]} : vector<2x8x96xf32> to vector<2x8x8xf32>
    %12 = vector.extract_strided_slice %4 {offsets = [0, 0, 32], sizes = [2, 8, 8], strides = [1, 1, 1]} : vector<2x8x96xf32> to vector<2x8x8xf32>
    %13 = vector.extract_strided_slice %4 {offsets = [0, 0, 64], sizes = [2, 8, 8], strides = [1, 1, 1]} : vector<2x8x96xf32> to vector<2x8x8xf32>
    %cst_6 = arith.constant -1.000000e+30 : f32
    %14 = vector.broadcast %cst_6 : f32 to vector<2x8x1xf32>
    %cst_7 = arith.constant 0.000000e+00 : f32
    %15 = vector.broadcast %cst_7 : f32 to vector<2x8x1xf32>
    %cst_8 = arith.constant 0.000000e+00 : f32
    %16 = vector.broadcast %cst_8 : f32 to vector<2x8x8xf32>
    "tpu.trace_start"() <{level = 10 : i32, message = "bqd,bkd->bqk"}> : () -> ()
    %cst_9 = arith.constant dense<0.000000e+00> : vector<2x8x8xf32>
    %17 = tpu.matmul %11, %12, %cst_9 {dimension_numbers = #tpu.dot_dimension_numbers<[2], [2], [1], [1], [0, 0, 0, 1, 1, 1], [0], [0]>} : vector<2x8x8xf32>, vector<2x8x8xf32>, vector<2x8x8xf32> -> vector<2x8x8xf32>
    "tpu.trace_stop"() : () -> ()
    %18 = vector.shape_cast %9 : vector<8x8xi1> to vector<1x8x8xi1>
    %cst_10 = arith.constant -1.000000e+30 : f32
    %19 = vector.shape_cast %18 : vector<1x8x8xi1> to vector<1x8x8xi1>
    %20 = vector.broadcast %19 : vector<1x8x8xi1> to vector<2x8x8xi1>
    %21 = vector.broadcast %cst_10 : f32 to vector<2x8x8xf32>
    %22 = arith.select %20, %17, %21 : vector<2x8x8xi1>, vector<2x8x8xf32>
    %cst_11 = arith.constant dense<0xFF800000> : vector<2x8xf32>
    %23 = vector.multi_reduction <maximumf>, %22, %cst_11 [2] : vector<2x8x8xf32> to vector<2x8xf32>
    %24 = vector.shape_cast %23 : vector<2x8xf32> to vector<2x8x1xf32>
    %25 = arith.maximumf %14, %24 : vector<2x8x1xf32>
    %26 = arith.subf %14, %25 : vector<2x8x1xf32>
    %27 = math.exp %26 : vector<2x8x1xf32>
    %28 = vector.broadcast %25 : vector<2x8x1xf32> to vector<2x8x8xf32>
    %29 = arith.subf %22, %28 : vector<2x8x8xf32>
    %30 = math.exp %29 : vector<2x8x8xf32>
    %31 = arith.mulf %27, %15 : vector<2x8x1xf32>
    %cst_12 = arith.constant dense<0.000000e+00> : vector<2x8xf32>
    %32 = vector.multi_reduction <add>, %30, %cst_12 [2] : vector<2x8x8xf32> to vector<2x8xf32>
    %33 = vector.shape_cast %32 : vector<2x8xf32> to vector<2x8x1xf32>
    %34 = arith.addf %31, %33 : vector<2x8x1xf32>
    %35 = vector.broadcast %27 : vector<2x8x1xf32> to vector<2x8x8xf32>
    %36 = arith.mulf %35, %16 : vector<2x8x8xf32>
    "tpu.trace_start"() <{level = 10 : i32, message = "bqk,bkd->bqd"}> : () -> ()
    %cst_13 = arith.constant dense<0.000000e+00> : vector<2x8x8xf32>
    %37 = tpu.matmul %30, %13, %cst_13 {dimension_numbers = #tpu.dot_dimension_numbers<[2], [1], [1], [2], [0, 0, 0, 1, 1, 2], [0], [0]>} : vector<2x8x8xf32>, vector<2x8x8xf32>, vector<2x8x8xf32> -> vector<2x8x8xf32>
    "tpu.trace_stop"() : () -> ()
    %38 = arith.addf %36, %37 : vector<2x8x8xf32>
    %39 = tpu.reciprocal %34 {approx = true} : vector<2x8x1xf32> -> vector<2x8x1xf32>
    %40 = vector.broadcast %39 : vector<2x8x1xf32> to vector<2x8x8xf32>
    %41 = arith.mulf %38, %40 : vector<2x8x8xf32>
    %42 = vector.extract_strided_slice %4 {offsets = [0, 0, 8], sizes = [2, 8, 8], strides = [1, 1, 1]} : vector<2x8x96xf32> to vector<2x8x8xf32>
    %43 = vector.extract_strided_slice %4 {offsets = [0, 0, 40], sizes = [2, 8, 8], strides = [1, 1, 1]} : vector<2x8x96xf32> to vector<2x8x8xf32>
    %44 = vector.extract_strided_slice %4 {offsets = [0, 0, 72], sizes = [2, 8, 8], strides = [1, 1, 1]} : vector<2x8x96xf32> to vector<2x8x8xf32>
    %cst_14 = arith.constant -1.000000e+30 : f32
    %45 = vector.broadcast %cst_14 : f32 to vector<2x8x1xf32>
    %cst_15 = arith.constant 0.000000e+00 : f32
    %46 = vector.broadcast %cst_15 : f32 to vector<2x8x1xf32>
    %cst_16 = arith.constant 0.000000e+00 : f32
    %47 = vector.broadcast %cst_16 : f32 to vector<2x8x8xf32>
    "tpu.trace_start"() <{level = 10 : i32, message = "bqd,bkd->bqk"}> : () -> ()
    %cst_17 = arith.constant dense<0.000000e+00> : vector<2x8x8xf32>
    %48 = tpu.matmul %42, %43, %cst_17 {dimension_numbers = #tpu.dot_dimension_numbers<[2], [2], [1], [1], [0, 0, 0, 1, 1, 1], [0], [0]>} : vector<2x8x8xf32>, vector<2x8x8xf32>, vector<2x8x8xf32> -> vector<2x8x8xf32>
    "tpu.trace_stop"() : () -> ()
    %49 = vector.shape_cast %9 : vector<8x8xi1> to vector<1x8x8xi1>
    %cst_18 = arith.constant -1.000000e+30 : f32
    %50 = vector.shape_cast %49 : vector<1x8x8xi1> to vector<1x8x8xi1>
    %51 = vector.broadcast %50 : vector<1x8x8xi1> to vector<2x8x8xi1>
    %52 = vector.broadcast %cst_18 : f32 to vector<2x8x8xf32>
    %53 = arith.select %51, %48, %52 : vector<2x8x8xi1>, vector<2x8x8xf32>
    %cst_19 = arith.constant dense<0xFF800000> : vector<2x8xf32>
    %54 = vector.multi_reduction <maximumf>, %53, %cst_19 [2] : vector<2x8x8xf32> to vector<2x8xf32>
    %55 = vector.shape_cast %54 : vector<2x8xf32> to vector<2x8x1xf32>
    %56 = arith.maximumf %45, %55 : vector<2x8x1xf32>
    %57 = arith.subf %45, %56 : vector<2x8x1xf32>
    %58 = math.exp %57 : vector<2x8x1xf32>
    %59 = vector.broadcast %56 : vector<2x8x1xf32> to vector<2x8x8xf32>
    %60 = arith.subf %53, %59 : vector<2x8x8xf32>
    %61 = math.exp %60 : vector<2x8x8xf32>
    %62 = arith.mulf %58, %46 : vector<2x8x1xf32>
    %cst_20 = arith.constant dense<0.000000e+00> : vector<2x8xf32>
    %63 = vector.multi_reduction <add>, %61, %cst_20 [2] : vector<2x8x8xf32> to vector<2x8xf32>
    %64 = vector.shape_cast %63 : vector<2x8xf32> to vector<2x8x1xf32>
    %65 = arith.addf %62, %64 : vector<2x8x1xf32>
    %66 = vector.broadcast %58 : vector<2x8x1xf32> to vector<2x8x8xf32>
    %67 = arith.mulf %66, %47 : vector<2x8x8xf32>
    "tpu.trace_start"() <{level = 10 : i32, message = "bqk,bkd->bqd"}> : () -> ()
    %cst_21 = arith.constant dense<0.000000e+00> : vector<2x8x8xf32>
    %68 = tpu.matmul %61, %44, %cst_21 {dimension_numbers = #tpu.dot_dimension_numbers<[2], [1], [1], [2], [0, 0, 0, 1, 1, 2], [0], [0]>} : vector<2x8x8xf32>, vector<2x8x8xf32>, vector<2x8x8xf32> -> vector<2x8x8xf32>
    "tpu.trace_stop"() : () -> ()
    %69 = arith.addf %67, %68 : vector<2x8x8xf32>
    %70 = tpu.reciprocal %65 {approx = true} : vector<2x8x1xf32> -> vector<2x8x1xf32>
    %71 = vector.broadcast %70 : vector<2x8x1xf32> to vector<2x8x8xf32>
    %72 = arith.mulf %69, %71 : vector<2x8x8xf32>
    %73 = vector.extract_strided_slice %4 {offsets = [0, 0, 16], sizes = [2, 8, 8], strides = [1, 1, 1]} : vector<2x8x96xf32> to vector<2x8x8xf32>
    %74 = vector.extract_strided_slice %4 {offsets = [0, 0, 48], sizes = [2, 8, 8], strides = [1, 1, 1]} : vector<2x8x96xf32> to vector<2x8x8xf32>
    %75 = vector.extract_strided_slice %4 {offsets = [0, 0, 80], sizes = [2, 8, 8], strides = [1, 1, 1]} : vector<2x8x96xf32> to vector<2x8x8xf32>
    %cst_22 = arith.constant -1.000000e+30 : f32
    %76 = vector.broadcast %cst_22 : f32 to vector<2x8x1xf32>
    %cst_23 = arith.constant 0.000000e+00 : f32
    %77 = vector.broadcast %cst_23 : f32 to vector<2x8x1xf32>
    %cst_24 = arith.constant 0.000000e+00 : f32
    %78 = vector.broadcast %cst_24 : f32 to vector<2x8x8xf32>
    "tpu.trace_start"() <{level = 10 : i32, message = "bqd,bkd->bqk"}> : () -> ()
    %cst_25 = arith.constant dense<0.000000e+00> : vector<2x8x8xf32>
    %79 = tpu.matmul %73, %74, %cst_25 {dimension_numbers = #tpu.dot_dimension_numbers<[2], [2], [1], [1], [0, 0, 0, 1, 1, 1], [0], [0]>} : vector<2x8x8xf32>, vector<2x8x8xf32>, vector<2x8x8xf32> -> vector<2x8x8xf32>
    "tpu.trace_stop"() : () -> ()
    %80 = vector.shape_cast %9 : vector<8x8xi1> to vector<1x8x8xi1>
    %cst_26 = arith.constant -1.000000e+30 : f32
    %81 = vector.shape_cast %80 : vector<1x8x8xi1> to vector<1x8x8xi1>
    %82 = vector.broadcast %81 : vector<1x8x8xi1> to vector<2x8x8xi1>
    %83 = vector.broadcast %cst_26 : f32 to vector<2x8x8xf32>
    %84 = arith.select %82, %79, %83 : vector<2x8x8xi1>, vector<2x8x8xf32>
    %cst_27 = arith.constant dense<0xFF800000> : vector<2x8xf32>
    %85 = vector.multi_reduction <maximumf>, %84, %cst_27 [2] : vector<2x8x8xf32> to vector<2x8xf32>
    %86 = vector.shape_cast %85 : vector<2x8xf32> to vector<2x8x1xf32>
    %87 = arith.maximumf %76, %86 : vector<2x8x1xf32>
    %88 = arith.subf %76, %87 : vector<2x8x1xf32>
    %89 = math.exp %88 : vector<2x8x1xf32>
    %90 = vector.broadcast %87 : vector<2x8x1xf32> to vector<2x8x8xf32>
    %91 = arith.subf %84, %90 : vector<2x8x8xf32>
    %92 = math.exp %91 : vector<2x8x8xf32>
    %93 = arith.mulf %89, %77 : vector<2x8x1xf32>
    %cst_28 = arith.constant dense<0.000000e+00> : vector<2x8xf32>
    %94 = vector.multi_reduction <add>, %92, %cst_28 [2] : vector<2x8x8xf32> to vector<2x8xf32>
    %95 = vector.shape_cast %94 : vector<2x8xf32> to vector<2x8x1xf32>
    %96 = arith.addf %93, %95 : vector<2x8x1xf32>
    %97 = vector.broadcast %89 : vector<2x8x1xf32> to vector<2x8x8xf32>
    %98 = arith.mulf %97, %78 : vector<2x8x8xf32>
    "tpu.trace_start"() <{level = 10 : i32, message = "bqk,bkd->bqd"}> : () -> ()
    %cst_29 = arith.constant dense<0.000000e+00> : vector<2x8x8xf32>
    %99 = tpu.matmul %92, %75, %cst_29 {dimension_numbers = #tpu.dot_dimension_numbers<[2], [1], [1], [2], [0, 0, 0, 1, 1, 2], [0], [0]>} : vector<2x8x8xf32>, vector<2x8x8xf32>, vector<2x8x8xf32> -> vector<2x8x8xf32>
    "tpu.trace_stop"() : () -> ()
    %100 = arith.addf %98, %99 : vector<2x8x8xf32>
    %101 = tpu.reciprocal %96 {approx = true} : vector<2x8x1xf32> -> vector<2x8x1xf32>
    %102 = vector.broadcast %101 : vector<2x8x1xf32> to vector<2x8x8xf32>
    %103 = arith.mulf %100, %102 : vector<2x8x8xf32>
    %104 = vector.extract_strided_slice %4 {offsets = [0, 0, 24], sizes = [2, 8, 8], strides = [1, 1, 1]} : vector<2x8x96xf32> to vector<2x8x8xf32>
    %105 = vector.extract_strided_slice %4 {offsets = [0, 0, 56], sizes = [2, 8, 8], strides = [1, 1, 1]} : vector<2x8x96xf32> to vector<2x8x8xf32>
    %106 = vector.extract_strided_slice %4 {offsets = [0, 0, 88], sizes = [2, 8, 8], strides = [1, 1, 1]} : vector<2x8x96xf32> to vector<2x8x8xf32>
    %cst_30 = arith.constant -1.000000e+30 : f32
    %107 = vector.broadcast %cst_30 : f32 to vector<2x8x1xf32>
    %cst_31 = arith.constant 0.000000e+00 : f32
    %108 = vector.broadcast %cst_31 : f32 to vector<2x8x1xf32>
    %cst_32 = arith.constant 0.000000e+00 : f32
    %109 = vector.broadcast %cst_32 : f32 to vector<2x8x8xf32>
    "tpu.trace_start"() <{level = 10 : i32, message = "bqd,bkd->bqk"}> : () -> ()
    %cst_33 = arith.constant dense<0.000000e+00> : vector<2x8x8xf32>
    %110 = tpu.matmul %104, %105, %cst_33 {dimension_numbers = #tpu.dot_dimension_numbers<[2], [2], [1], [1], [0, 0, 0, 1, 1, 1], [0], [0]>} : vector<2x8x8xf32>, vector<2x8x8xf32>, vector<2x8x8xf32> -> vector<2x8x8xf32>
    "tpu.trace_stop"() : () -> ()
    %111 = vector.shape_cast %9 : vector<8x8xi1> to vector<1x8x8xi1>
    %cst_34 = arith.constant -1.000000e+30 : f32
    %112 = vector.shape_cast %111 : vector<1x8x8xi1> to vector<1x8x8xi1>
    %113 = vector.broadcast %112 : vector<1x8x8xi1> to vector<2x8x8xi1>
    %114 = vector.broadcast %cst_34 : f32 to vector<2x8x8xf32>
    %115 = arith.select %113, %110, %114 : vector<2x8x8xi1>, vector<2x8x8xf32>
    %cst_35 = arith.constant dense<0xFF800000> : vector<2x8xf32>
    %116 = vector.multi_reduction <maximumf>, %115, %cst_35 [2] : vector<2x8x8xf32> to vector<2x8xf32>
    %117 = vector.shape_cast %116 : vector<2x8xf32> to vector<2x8x1xf32>
    %118 = arith.maximumf %107, %117 : vector<2x8x1xf32>
    %119 = arith.subf %107, %118 : vector<2x8x1xf32>
    %120 = math.exp %119 : vector<2x8x1xf32>
    %121 = vector.broadcast %118 : vector<2x8x1xf32> to vector<2x8x8xf32>
    %122 = arith.subf %115, %121 : vector<2x8x8xf32>
    %123 = math.exp %122 : vector<2x8x8xf32>
    %124 = arith.mulf %120, %108 : vector<2x8x1xf32>
    %cst_36 = arith.constant dense<0.000000e+00> : vector<2x8xf32>
    %125 = vector.multi_reduction <add>, %123, %cst_36 [2] : vector<2x8x8xf32> to vector<2x8xf32>
    %126 = vector.shape_cast %125 : vector<2x8xf32> to vector<2x8x1xf32>
    %127 = arith.addf %124, %126 : vector<2x8x1xf32>
    %128 = vector.broadcast %120 : vector<2x8x1xf32> to vector<2x8x8xf32>
    %129 = arith.mulf %128, %109 : vector<2x8x8xf32>
    "tpu.trace_start"() <{level = 10 : i32, message = "bqk,bkd->bqd"}> : () -> ()
    %cst_37 = arith.constant dense<0.000000e+00> : vector<2x8x8xf32>
    %130 = tpu.matmul %123, %106, %cst_37 {dimension_numbers = #tpu.dot_dimension_numbers<[2], [1], [1], [2], [0, 0, 0, 1, 1, 2], [0], [0]>} : vector<2x8x8xf32>, vector<2x8x8xf32>, vector<2x8x8xf32> -> vector<2x8x8xf32>
    "tpu.trace_stop"() : () -> ()
    %131 = arith.addf %129, %130 : vector<2x8x8xf32>
    %132 = tpu.reciprocal %127 {approx = true} : vector<2x8x1xf32> -> vector<2x8x1xf32>
    %133 = vector.broadcast %132 : vector<2x8x1xf32> to vector<2x8x8xf32>
    %134 = arith.mulf %131, %133 : vector<2x8x8xf32>
    %135 = tpu.concatenate %41, %72, %103, %134 in 2 : vector<2x8x8xf32>, vector<2x8x8xf32>, vector<2x8x8xf32>, vector<2x8x8xf32> -> vector<2x8x32xf32>
    %136 = vector.shape_cast %135 : vector<2x8x32xf32> to vector<16x32xf32>
    %cst_38 = arith.constant dense<0.000000e+00> : vector<16x32xf32>
    %137 = tpu.matmul %136, %10, %cst_38 {dimension_numbers = #tpu.dot_dimension_numbers<[1], [0], [0], [1], [0, 0, 1, 1], [], []>} : vector<16x32xf32>, vector<32x32xf32>, vector<16x32xf32> -> vector<16x32xf32>
    %c0_39 = arith.constant 0 : index
    %c0_40 = arith.constant 0 : index
    %138 = vector.load %arg4[%c0_39, %c0_40] : memref<1x32xf32, #tpu.memory_space<vmem>>, vector<1x32xf32>
    %139 = vector.broadcast %138 : vector<1x32xf32> to vector<16x32xf32>
    %140 = arith.addf %137, %139 : vector<16x32xf32>
    %141 = vector.shape_cast %140 : vector<16x32xf32> to vector<2x8x32xf32>
    %c0_41 = arith.constant 0 : index
    %c0_42 = arith.constant 0 : index
    %c0_43 = arith.constant 0 : index
    %142 = vector.load %arg5[%c0_41, %c0_42, %c0_43] : memref<2x8x32xf32, #tpu.memory_space<vmem>>, vector<2x8x32xf32>
    tpu.vector_store %arg5[%c0_41, %c0_42, %c0_43], %141 {strides = array<i32>} : memref<2x8x32xf32, #tpu.memory_space<vmem>>, vector<2x8x32xf32>,
    return
  }
  func.func @transform_0(%arg0: i32) -> (i32, i32, i32) {
    %c0_i32 = arith.constant 0 : i32
    %c0_i32_0 = arith.constant 0 : i32
    %c0_i32_1 = arith.constant 0 : i32
    return %arg0, %c0_i32, %c0_i32_0 : i32, i32, i32
  }
  func.func @transform_1(%arg0: i32) -> (i32, i32) {
    %c0_i32 = arith.constant 0 : i32
    %c0_i32_0 = arith.constant 0 : i32
    %c0_i32_1 = arith.constant 0 : i32
    return %c0_i32, %c0_i32_0 : i32, i32
  }
  func.func @transform_2(%arg0: i32) -> (i32, i32) {
    %c0_i32 = arith.constant 0 : i32
    %c0_i32_0 = arith.constant 0 : i32
    %c0_i32_1 = arith.constant 0 : i32
    return %c0_i32, %c0_i32_0 : i32, i32
  }
  func.func @transform_3(%arg0: i32) -> (i32, i32) {
    %c0_i32 = arith.constant 0 : i32
    %c0_i32_0 = arith.constant 0 : i32
    %c0_i32_1 = arith.constant 0 : i32
    return %c0_i32, %c0_i32_0 : i32, i32
  }
  func.func @transform_4(%arg0: i32) -> (i32, i32, i32) {
    %c0_i32 = arith.constant 0 : i32
    %c0_i32_0 = arith.constant 0 : i32
    %c0_i32_1 = arith.constant 0 : i32
    return %arg0, %c0_i32, %c0_i32_0 : i32, i32, i32
  }
}

</mosaic_0001>

<llo_original>
// kernel: tpu_custom_call.1
$region0: #{tpu_custom_call.1}
  #allocation0 [shape = 'u32[]', space=smem, size = 0x4, offset = 0x4, fixed_abs, tag = 'smem constant byte address 0x4 - core index']
  #allocation1 [shape = 'u32[144,128]{1,0:T(1,128)}', space=vmem, size = 0x12000, scoped, tag = 'internal scratch']
  %s0 = inlined_call_operand.hbm [shape: f32[2,8,32], index: 0, kind: input, shape index: {}]
  %s1 = inlined_call_operand.hbm [shape: f32[32,96], index: 1, kind: input, shape index: {}]
  %s2 = inlined_call_operand.hbm [shape: f32[32,32], index: 2, kind: input, shape index: {}]
  %s3 = inlined_call_operand.vmem [shape: f32[1,32], index: 3, kind: input, shape index: {}]
  %s4 = inlined_call_operand.hbm [shape: f32[2,8,32], index: 4, kind: output, shape index: {}]
  %s5 = sld [smem:[#allocation0]]
  $region38: #{tpu_custom_call.1} parent=0
    _
  %s7 = ssub.s32 1, %s5
  %s8 = scalar_select 0, %s7, %s5
  $region1: #{tpu_custom_call.1} parent=0
    #allocation2 [shape = 'u8[8192]{0}', space=vmem, size = 0x2000, scoped, tag = 'input window, operand 0, single buffered']
    #allocation3 [shape = 's32[1]{0}', space=sflag, size = 0x4, scoped, tag = 'scoped memory for tpu_custom_call.1']
    #allocation4 [shape = 's32[1]{0}', space=sflag, size = 0x4, scoped, tag = 'scoped memory for tpu_custom_call.1']
    #allocation5 [shape = 'u8[16384]{0}', space=vmem, size = 0x4000, scoped, tag = 'input window, operand 1, single buffered']
    #allocation6 [shape = 's32[1]{0}', space=sflag, size = 0x4, scoped, tag = 'scoped memory for tpu_custom_call.1']
    #allocation7 [shape = 'u8[16384]{0}', space=vmem, size = 0x4000, scoped, tag = 'input window, operand 2, single buffered']
    #allocation8 [shape = 'u8[8192]{0}', space=vmem, size = 0x2000, scoped, tag = 'output window, operand 0, single buffered']
    %9 = vsyncpa [#allocation3], 0
    %10 = vsyncpa [#allocation6], 0
    %11 = vsyncpa [#allocation4], 0
    // Predicated region
    $region2: #{tpu_custom_call.1} parent=1 // pred_check
      _
    $region3: #{tpu_custom_call.1} parent=1 // pred_check_branch
      %13 = sbr.rel (0) target = $region5
    $region4: #{tpu_custom_call.1} parent=1 // pred_region
      %s15 = ssub.s32 256, 256
      %16 = vsyncadd [#allocation3], %s15
      %s17 = sshll.u32 [#allocation2], 4
      %s18 = int_to_ptr.vmem [resolvable:$true] %s17
      %23 = dma.hbm_to_vmem [thread:$0]  %s0, 256, %s18, [#allocation3], 128, 128, 8
    $region5: #{tpu_custom_call.1} parent=1 // pred_fallthru
      _
    // Predicated region
    $region6: #{tpu_custom_call.1} parent=1 // pred_check
      _
    $region7: #{tpu_custom_call.1} parent=1 // pred_check_branch
      %25 = sbr.rel (0) target = $region9
    $region8: #{tpu_custom_call.1} parent=1 // pred_region
      %s27 = ssub.s32 512, 512
      %28 = vsyncadd [#allocation6], %s27
      %s29 = sshll.u32 [#allocation5], 4
      %s30 = int_to_ptr.vmem [resolvable:$true] %s29
      %35 = dma.hbm_to_vmem [thread:$0]  %s1, 512, %s30, [#allocation6], 128, 128, 8
    $region9: #{tpu_custom_call.1} parent=1 // pred_fallthru
      _
    // Predicated region
    $region10: #{tpu_custom_call.1} parent=1 // pred_check
      _
    $region11: #{tpu_custom_call.1} parent=1 // pred_check_branch
      %37 = sbr.rel (0) target = $region13
    $region12: #{tpu_custom_call.1} parent=1 // pred_region
      %s39 = ssub.s32 512, 512
      %40 = vsyncadd [#allocation6], %s39
      %s41 = sshll.u32 [#allocation7], 4
      %s42 = int_to_ptr.vmem [resolvable:$true] %s41
      %47 = dma.hbm_to_vmem [thread:$0]  %s2, 512, %s42, [#allocation6], 128, 128, 8
    $region13: #{tpu_custom_call.1} parent=1 // pred_fallthru
      _
    // Predicated region
    $region14: #{tpu_custom_call.1} parent=1 // pred_check
      _
    $region15: #{tpu_custom_call.1} parent=1 // pred_check_branch
      %49 = sbr.rel (0) target = $region17
    $region16: #{tpu_custom_call.1} parent=1 // pred_region
      _
    $region17: #{tpu_custom_call.1} parent=1 // pred_fallthru
      _
    // Predicated region
    $region18: #{tpu_custom_call.1} parent=1 // pred_check
      _
    $region19: #{tpu_custom_call.1} parent=1 // pred_check_branch
      %51 = sbr.rel (0) target = $region21
    $region20: #{tpu_custom_call.1} parent=1 // pred_region
      %52 = dma.done [#allocation3], 256
    $region21: #{tpu_custom_call.1} parent=1 // pred_fallthru
      _
    // Predicated region
    $region22: #{tpu_custom_call.1} parent=1 // pred_check
      _
    $region23: #{tpu_custom_call.1} parent=1 // pred_check_branch
      %54 = sbr.rel (0) target = $region25
    $region24: #{tpu_custom_call.1} parent=1 // pred_region
      %55 = dma.done [#allocation6], 512
    $region25: #{tpu_custom_call.1} parent=1 // pred_fallthru
      _
    // Predicated region
    $region26: #{tpu_custom_call.1} parent=1 // pred_check
      _
    $region27: #{tpu_custom_call.1} parent=1 // pred_check_branch
      %57 = sbr.rel (0) target = $region29
    $region28: #{tpu_custom_call.1} parent=1 // pred_region
      %58 = dma.done [#allocation6], 512
    $region29: #{tpu_custom_call.1} parent=1 // pred_fallthru
      _
    %v59 = vld [vmem:[#allocation2] sm:$0xff]
    %v60 = vld [vmem:[#allocation2 + $0x8] sm:$0xff]
    %v61 = vld [vmem:[#allocation5] sm:$0xff]
    %v62 = vld [vmem:[#allocation5 + $0x8] sm:$0xff]
    %v63 = vld [vmem:[#allocation5 + $0x10] sm:$0xff]
    %v64 = vld [vmem:[#allocation5 + $0x18] sm:$0xff]
    %vm65 = vcmask 261120
    %v67 = vsel %vm65, %v59, 0
    %v70 = vsel %vm65, %v60, 0
    %72 = vmatprep.subr.mxu0 0.0
    %73 = vmatpush1.msra.mxu0 %v61
    %74 = vmatprep.subr.mxu0 0.0
    %75 = vmatpush1.msra.mxu0 %v62
    %76 = vmatprep.subr.mxu0 0.0
    %77 = vmatpush1.msra.mxu0 %v63
    %78 = vmatprep.subr.mxu0 0.0
    %79 = vmatpush1.msra.mxu0 %v64
    %80 = vmatprep.subr.mxu0 0.0
    %81 = vmatpush1.msra.mxu0 0.0
    %82 = vmatprep.subr.mxu0 0.0
    %83 = vmatpush1.msra.mxu0 0.0
    %84 = vmatprep.subr.mxu0 0.0
    %85 = vmatpush1.msra.mxu0 0.0
    %86 = vmatprep.subr.mxu0 0.0
    %87 = vmatpush1.msra.mxu0 0.0
    %88 = vmatprep.subr.mxu0 0.0
    %89 = vmatpush1.msra.mxu0 0.0
    %90 = vmatprep.subr.mxu0 0.0
    %91 = vmatpush1.msra.mxu0 0.0
    %92 = vmatprep.subr.mxu0 0.0
    %93 = vmatpush1.msra.mxu0 0.0
    %94 = vmatprep.subr.mxu0 0.0
    %95 = vmatpush1.msra.mxu0 0.0
    %96 = vmatprep.subr.mxu0 0.0
    %97 = vmatpush1.msra.mxu0 0.0
    %98 = vmatprep.subr.mxu0 0.0
    %99 = vmatpush1.msra.mxu0 0.0
    %100 = vmatprep.subr.mxu0 0.0
    %101 = vmatpush1.msra.mxu0 0.0
    %102 = vmatprep.subr.mxu0 0.0
    %103 = vmatpush1.msra.mxu0 0.0
    %104 = vmatprep.subr.mxu0 0.0
    %105 = vmatpush1.msra.mxu0 0.0
    %106 = vmatprep.subr.mxu0 0.0
    %107 = vmatpush1.msra.mxu0 0.0
    %108 = vmatprep.subr.mxu0 0.0
    %109 = vmatpush1.msra.mxu0 0.0
    %110 = vmatprep.subr.mxu0 0.0
    %111 = vmatpush1.msra.mxu0 0.0
    %112 = vmatprep.subr.mxu0 0.0
    %113 = vmatpush1.msra.mxu0 0.0
    %114 = vmatprep.subr.mxu0 0.0
    %115 = vmatpush1.msra.mxu0 0.0
    %116 = vmatprep.subr.mxu0 0.0
    %117 = vmatpush1.msra.mxu0 0.0
    %118 = vmatprep.subr.mxu0 0.0
    %119 = vmatpush1.msra.mxu0 0.0
    %120 = vmatprep.subr.mxu0 0.0
    %121 = vmatpush1.msra.mxu0 0.0
    %122 = vmatprep.subr.mxu0 0.0
    %123 = vmatpush1.msra.mxu0 0.0
    %124 = vmatprep.subr.mxu0 0.0
    %125 = vmatpush1.msra.mxu0 0.0
    %126 = vmatprep.subr.mxu0 0.0
    %127 = vmatpush1.msra.mxu0 0.0
    %128 = vmatprep.subr.mxu0 0.0
    %129 = vmatpush1.msra.mxu0 0.0
    %130 = vmatprep.subr.mxu0 0.0
    %131 = vmatpush1.msra.mxu0 0.0
    %132 = vmatprep.subr.mxu0 0.0
    %133 = vmatpush1.msra.mxu0 0.0
    %134 = vmatprep.subr.mxu0 0.0
    %135 = vmatpush1.msra.mxu0 0.0
    %136 = vmatprep.mubr.f32.mxu0 0.0
    %137 = vmatmul.mubr.f32.gmra.mrb[0].mxu0 %v67
    %v138 = vpop.f32.mrb[0].mxu0
    %v139 = vadd.f32 0.0, %v138
    %v140 = vpop.f32.mrb[0].mxu0
    %141 = vmatprep.mubr.f32.mxu0 0.0
    %142 = vmatmul.mubr.f32.gmra.mrb[0].mxu0 %v70
    %v143 = vpop.f32.mrb[0].mxu0
    %v144 = vadd.f32 0.0, %v143
    %v145 = vpop.f32.mrb[0].mxu0
    %146 = vdwg.mxu0
    %v147 = vlaneseq
    %v148 = vshrl.u32 %v147, 7
    %v149 = vlaneseq
    %v150 = vand.u32 %v149, 127
    %vm151 = vcmp.le.s32.totalorder %v150, %v148
    %v152 = vld [vmem:[#allocation7] sm:$0xff]
    %v153 = vld [vmem:[#allocation7 + $0x8] sm:$0xff]
    %v154 = vld [vmem:[#allocation7 + $0x10] sm:$0xff]
    %v155 = vld [vmem:[#allocation7 + $0x18] sm:$0xff]
    %157 = vrot.lane.b32.xlu0 %v139, 96
    %v158 = vpop.permute.xlu0 %157
    %vm159 = vcmask 64512
    %v160 = vsel %vm159, %v139, 0
    %v162 = vsel %vm159, %v158, 0
    %164 = vmatprep.subr.mxu0 0.0
    %165 = vmatpush1.xpose.msra.mxu0 %v162
    %166 = vmatprep.subr.mxu0 0.0
    %167 = vmatpush1.xpose.msra.mxu0 0.0
    %168 = vmatprep.subr.mxu0 0.0
    %169 = vmatpush1.xpose.msra.mxu0 0.0
    %170 = vmatprep.subr.mxu0 0.0
    %171 = vmatpush1.xpose.msra.mxu0 0.0
    %172 = vmatprep.subr.mxu0 0.0
    %173 = vmatpush1.xpose.msra.mxu0 0.0
    %174 = vmatprep.subr.mxu0 0.0
    %175 = vmatpush1.xpose.msra.mxu0 0.0
    %176 = vmatprep.subr.mxu0 0.0
    %177 = vmatpush1.xpose.msra.mxu0 0.0
    %178 = vmatprep.subr.mxu0 0.0
    %179 = vmatpush1.xpose.msra.mxu0 0.0
    %180 = vmatprep.subr.mxu0 0.0
    %181 = vmatpush1.xpose.msra.mxu0 0.0
    %182 = vmatprep.subr.mxu0 0.0
    %183 = vmatpush1.xpose.msra.mxu0 0.0
    %184 = vmatprep.subr.mxu0 0.0
    %185 = vmatpush1.xpose.msra.mxu0 0.0
    %186 = vmatprep.subr.mxu0 0.0
    %187 = vmatpush1.xpose.msra.mxu0 0.0
    %188 = vmatprep.subr.mxu0 0.0
    %189 = vmatpush1.xpose.msra.mxu0 0.0
    %190 = vmatprep.subr.mxu0 0.0
    %191 = vmatpush1.xpose.msra.mxu0 0.0
    %192 = vmatprep.subr.mxu0 0.0
    %193 = vmatpush1.xpose.msra.mxu0 0.0
    %194 = vmatprep.subr.mxu0 0.0
    %195 = vmatpush1.xpose.msra.mxu0 0.0
    %196 = vmatprep.subr.mxu0 0.0
    %197 = vmatpush1.xpose.msra.mxu0 0.0
    %198 = vmatprep.subr.mxu0 0.0
    %199 = vmatpush1.xpose.msra.mxu0 0.0
    %200 = vmatprep.subr.mxu0 0.0
    %201 = vmatpush1.xpose.msra.mxu0 0.0
    %202 = vmatprep.subr.mxu0 0.0
    %203 = vmatpush1.xpose.msra.mxu0 0.0
    %204 = vmatprep.subr.mxu0 0.0
    %205 = vmatpush1.xpose.msra.mxu0 0.0
    %206 = vmatprep.subr.mxu0 0.0
    %207 = vmatpush1.xpose.msra.mxu0 0.0
    %208 = vmatprep.subr.mxu0 0.0
    %209 = vmatpush1.xpose.msra.mxu0 0.0
    %210 = vmatprep.subr.mxu0 0.0
    %211 = vmatpush1.xpose.msra.mxu0 0.0
    %212 = vmatprep.subr.mxu0 0.0
    %213 = vmatpush1.xpose.msra.mxu0 0.0
    %214 = vmatprep.subr.mxu0 0.0
    %215 = vmatpush1.xpose.msra.mxu0 0.0
    %216 = vmatprep.subr.mxu0 0.0
    %217 = vmatpush1.xpose.msra.mxu0 0.0
    %218 = vmatprep.subr.mxu0 0.0
    %219 = vmatpush1.xpose.msra.mxu0 0.0
    %220 = vmatprep.subr.mxu0 0.0
    %221 = vmatpush1.xpose.msra.mxu0 0.0
    %222 = vmatprep.subr.mxu0 0.0
    %223 = vmatpush1.xpose.msra.mxu0 0.0
    %224 = vmatprep.subr.mxu0 0.0
    %225 = vmatpush1.xpose.msra.mxu0 0.0
    %226 = vmatprep.subr.mxu0 0.0
    %227 = vmatpush1.xpose.msra.mxu0 0.0
    %228 = vmatprep.mubr.f32.mxu0 0.0
    %229 = vmatmul.mubr.f32.gmra.mrb[0].mxu0 %v160
    %v230 = vpop.f32.mrb[0].mxu0
    %v231 = vadd.f32 0.0, %v230
    %v232 = vpop.f32.mrb[0].mxu0
    %233 = vdwg.mxu0
    %235 = vrot.lane.b32.xlu0 %v144, 96
    %v236 = vpop.permute.xlu0 %235
    %v237 = vsel %vm159, %v144, 0
    %v239 = vsel %vm159, %v236, 0
    %241 = vmatprep.subr.mxu0 0.0
    %242 = vmatpush1.xpose.msra.mxu0 %v239
    %243 = vmatprep.subr.mxu0 0.0
    %244 = vmatpush1.xpose.msra.mxu0 0.0
    %245 = vmatprep.subr.mxu0 0.0
    %246 = vmatpush1.xpose.msra.mxu0 0.0
    %247 = vmatprep.subr.mxu0 0.0
    %248 = vmatpush1.xpose.msra.mxu0 0.0
    %249 = vmatprep.subr.mxu0 0.0
    %250 = vmatpush1.xpose.msra.mxu0 0.0
    %251 = vmatprep.subr.mxu0 0.0
    %252 = vmatpush1.xpose.msra.mxu0 0.0
    %253 = vmatprep.subr.mxu0 0.0
    %254 = vmatpush1.xpose.msra.mxu0 0.0
    %255 = vmatprep.subr.mxu0 0.0
    %256 = vmatpush1.xpose.msra.mxu0 0.0
    %257 = vmatprep.subr.mxu0 0.0
    %258 = vmatpush1.xpose.msra.mxu0 0.0
    %259 = vmatprep.subr.mxu0 0.0
    %260 = vmatpush1.xpose.msra.mxu0 0.0
    %261 = vmatprep.subr.mxu0 0.0
    %262 = vmatpush1.xpose.msra.mxu0 0.0
    %263 = vmatprep.subr.mxu0 0.0
    %264 = vmatpush1.xpose.msra.mxu0 0.0
    %265 = vmatprep.subr.mxu0 0.0
    %266 = vmatpush1.xpose.msra.mxu0 0.0
    %267 = vmatprep.subr.mxu0 0.0
    %268 = vmatpush1.xpose.msra.mxu0 0.0
    %269 = vmatprep.subr.mxu0 0.0
    %270 = vmatpush1.xpose.msra.mxu0 0.0
    %271 = vmatprep.subr.mxu0 0.0
    %272 = vmatpush1.xpose.msra.mxu0 0.0
    %273 = vmatprep.subr.mxu0 0.0
    %274 = vmatpush1.xpose.msra.mxu0 0.0
    %275 = vmatprep.subr.mxu0 0.0
    %276 = vmatpush1.xpose.msra.mxu0 0.0
    %277 = vmatprep.subr.mxu0 0.0
    %278 = vmatpush1.xpose.msra.mxu0 0.0
    %279 = vmatprep.subr.mxu0 0.0
    %280 = vmatpush1.xpose.msra.mxu0 0.0
    %281 = vmatprep.subr.mxu0 0.0
    %282 = vmatpush1.xpose.msra.mxu0 0.0
    %283 = vmatprep.subr.mxu0 0.0
    %284 = vmatpush1.xpose.msra.mxu0 0.0
    %285 = vmatprep.subr.mxu0 0.0
    %286 = vmatpush1.xpose.msra.mxu0 0.0
    %287 = vmatprep.subr.mxu0 0.0
    %288 = vmatpush1.xpose.msra.mxu0 0.0
    %289 = vmatprep.subr.mxu0 0.0
    %290 = vmatpush1.xpose.msra.mxu0 0.0
    %291 = vmatprep.subr.mxu0 0.0
    %292 = vmatpush1.xpose.msra.mxu0 0.0
    %293 = vmatprep.subr.mxu0 0.0
    %294 = vmatpush1.xpose.msra.mxu0 0.0
    %295 = vmatprep.subr.mxu0 0.0
    %296 = vmatpush1.xpose.msra.mxu0 0.0
    %297 = vmatprep.subr.mxu0 0.0
    %298 = vmatpush1.xpose.msra.mxu0 0.0
    %299 = vmatprep.subr.mxu0 0.0
    %300 = vmatpush1.xpose.msra.mxu0 0.0
    %301 = vmatprep.subr.mxu0 0.0
    %302 = vmatpush1.xpose.msra.mxu0 0.0
    %303 = vmatprep.subr.mxu0 0.0
    %304 = vmatpush1.xpose.msra.mxu0 0.0
    %305 = vmatprep.mubr.f32.mxu0 0.0
    %306 = vmatmul.mubr.f32.gmra.mrb[0].mxu0 %v237
    %v307 = vpop.f32.mrb[0].mxu0
    %v308 = vadd.f32 0.0, %v307
    %v309 = vpop.f32.mrb[0].mxu0
    %310 = vdwg.mxu0
    %v311 = vsel %vm151, 1, 0
    %vm312 = vcmp.eq.s32.totalorder %v311, 1
    %v313 = vsel %vm312, %v231, -1e+30
    %v314 = vsel %vm312, %v308, -1e+30
    %v315 = vsel %vm159, %v313, -inf
    %316 = vmax.xlane.f32.xlu0 %v315
    %v317 = vpop.xlane.xlu0 %316
    %v318 = vsel %vm159, %v314, -inf
    %319 = vmax.xlane.f32.xlu0 %v318
    %v320 = vpop.xlane.xlu0 %319
    %v321 = vmax.f32 %v317, -1e+30
    %v322 = vmax.f32 %v320, -1e+30
    %v323 = vsub.f32 -1e+30, %v321
    %v324 = vsub.f32 -1e+30, %v322
    %v325 = vmul.f32 %v323, 1.442695
    %v326 = vpow.pop %v325
    %v327 = vmul.f32 %v324, 1.442695
    %v328 = vpow.pop %v327
    %v329 = vsub.f32 %v313, %v321
    %v330 = vsub.f32 %v314, %v322
    %v331 = vmul.f32 %v329, 1.442695
    %v332 = vpow.pop %v331
    %v333 = vmul.f32 %v330, 1.442695
    %v334 = vpow.pop %v333
    %v335 = vmul.f32 %v326, 0.0
    %v336 = vmul.f32 %v328, 0.0
    %v337 = vsel %vm159, %v332, 0.0
    %338 = vadd.xlane.f32.xlu0 %v337
    %v339 = vpop.xlane.xlu0 %338
    %v340 = vsel %vm159, %v334, 0.0
    %341 = vadd.xlane.f32.xlu0 %v340
    %v342 = vpop.xlane.xlu0 %341
    %v343 = vadd.f32 %v335, %v339
    %v344 = vadd.f32 %v336, %v342
    %345 = vrot.lane.b32.xlu0 %v139, 64
    %v346 = vpop.permute.xlu0 %345
    %v349 = vsel %vm159, %v332, 0
    %351 = vmatprep.subr.mxu0 0.0
    %352 = vmatpush1.msra.mxu0 %v346
    %353 = vmatprep.subr.mxu0 0.0
    %354 = vmatpush1.msra.mxu0 0.0
    %355 = vmatprep.subr.mxu0 0.0
    %356 = vmatpush1.msra.mxu0 0.0
    %357 = vmatprep.subr.mxu0 0.0
    %358 = vmatpush1.msra.mxu0 0.0
    %359 = vmatprep.subr.mxu0 0.0
    %360 = vmatpush1.msra.mxu0 0.0
    %361 = vmatprep.subr.mxu0 0.0
    %362 = vmatpush1.msra.mxu0 0.0
    %363 = vmatprep.subr.mxu0 0.0
    %364 = vmatpush1.msra.mxu0 0.0
    %365 = vmatprep.subr.mxu0 0.0
    %366 = vmatpush1.msra.mxu0 0.0
    %367 = vmatprep.subr.mxu0 0.0
    %368 = vmatpush1.msra.mxu0 0.0
    %369 = vmatprep.subr.mxu0 0.0
    %370 = vmatpush1.msra.mxu0 0.0
    %371 = vmatprep.subr.mxu0 0.0
    %372 = vmatpush1.msra.mxu0 0.0
    %373 = vmatprep.subr.mxu0 0.0
    %374 = vmatpush1.msra.mxu0 0.0
    %375 = vmatprep.subr.mxu0 0.0
    %376 = vmatpush1.msra.mxu0 0.0
    %377 = vmatprep.subr.mxu0 0.0
    %378 = vmatpush1.msra.mxu0 0.0
    %379 = vmatprep.subr.mxu0 0.0
    %380 = vmatpush1.msra.mxu0 0.0
    %381 = vmatprep.subr.mxu0 0.0
    %382 = vmatpush1.msra.mxu0 0.0
    %383 = vmatprep.subr.mxu0 0.0
    %384 = vmatpush1.msra.mxu0 0.0
    %385 = vmatprep.subr.mxu0 0.0
    %386 = vmatpush1.msra.mxu0 0.0
    %387 = vmatprep.subr.mxu0 0.0
    %388 = vmatpush1.msra.mxu0 0.0
    %389 = vmatprep.subr.mxu0 0.0
    %390 = vmatpush1.msra.mxu0 0.0
    %391 = vmatprep.subr.mxu0 0.0
    %392 = vmatpush1.msra.mxu0 0.0
    %393 = vmatprep.subr.mxu0 0.0
    %394 = vmatpush1.msra.mxu0 0.0
    %395 = vmatprep.subr.mxu0 0.0
    %396 = vmatpush1.msra.mxu0 0.0
    %397 = vmatprep.subr.mxu0 0.0
    %398 = vmatpush1.msra.mxu0 0.0
    %399 = vmatprep.subr.mxu0 0.0
    %400 = vmatpush1.msra.mxu0 0.0
    %401 = vmatprep.subr.mxu0 0.0
    %402 = vmatpush1.msra.mxu0 0.0
    %403 = vmatprep.subr.mxu0 0.0
    %404 = vmatpush1.msra.mxu0 0.0
    %405 = vmatprep.subr.mxu0 0.0
    %406 = vmatpush1.msra.mxu0 0.0
    %407 = vmatprep.subr.mxu0 0.0
    %408 = vmatpush1.msra.mxu0 0.0
    %409 = vmatprep.subr.mxu0 0.0
    %410 = vmatpush1.msra.mxu0 0.0
    %411 = vmatprep.subr.mxu0 0.0
    %412 = vmatpush1.msra.mxu0 0.0
    %413 = vmatprep.subr.mxu0 0.0
    %414 = vmatpush1.msra.mxu0 0.0
    %415 = vmatprep.mubr.f32.mxu0 0.0
    %416 = vmatmul.mubr.f32.gmra.mrb[0].mxu0 %v349
    %v417 = vpop.f32.mrb[0].mxu0
    %v418 = vadd.f32 0.0, %v417
    %v419 = vpop.f32.mrb[0].mxu0
    %420 = vdwg.mxu0
    %421 = vrot.lane.b32.xlu0 %v144, 64
    %v422 = vpop.permute.xlu0 %421
    %v425 = vsel %vm159, %v334, 0
    %427 = vmatprep.subr.mxu0 0.0
    %428 = vmatpush1.msra.mxu0 %v422
    %429 = vmatprep.subr.mxu0 0.0
    %430 = vmatpush1.msra.mxu0 0.0
    %431 = vmatprep.subr.mxu0 0.0
    %432 = vmatpush1.msra.mxu0 0.0
    %433 = vmatprep.subr.mxu0 0.0
    %434 = vmatpush1.msra.mxu0 0.0
    %435 = vmatprep.subr.mxu0 0.0
    %436 = vmatpush1.msra.mxu0 0.0
    %437 = vmatprep.subr.mxu0 0.0
    %438 = vmatpush1.msra.mxu0 0.0
    %439 = vmatprep.subr.mxu0 0.0
    %440 = vmatpush1.msra.mxu0 0.0
    %441 = vmatprep.subr.mxu0 0.0
    %442 = vmatpush1.msra.mxu0 0.0
    %443 = vmatprep.subr.mxu0 0.0
    %444 = vmatpush1.msra.mxu0 0.0
    %445 = vmatprep.subr.mxu0 0.0
    %446 = vmatpush1.msra.mxu0 0.0
    %447 = vmatprep.subr.mxu0 0.0
    %448 = vmatpush1.msra.mxu0 0.0
    %449 = vmatprep.subr.mxu0 0.0
    %450 = vmatpush1.msra.mxu0 0.0
    %451 = vmatprep.subr.mxu0 0.0
    %452 = vmatpush1.msra.mxu0 0.0
    %453 = vmatprep.subr.mxu0 0.0
    %454 = vmatpush1.msra.mxu0 0.0
    %455 = vmatprep.subr.mxu0 0.0
    %456 = vmatpush1.msra.mxu0 0.0
    %457 = vmatprep.subr.mxu0 0.0
    %458 = vmatpush1.msra.mxu0 0.0
    %459 = vmatprep.subr.mxu0 0.0
    %460 = vmatpush1.msra.mxu0 0.0
    %461 = vmatprep.subr.mxu0 0.0
    %462 = vmatpush1.msra.mxu0 0.0
    %463 = vmatprep.subr.mxu0 0.0
    %464 = vmatpush1.msra.mxu0 0.0
    %465 = vmatprep.subr.mxu0 0.0
    %466 = vmatpush1.msra.mxu0 0.0
    %467 = vmatprep.subr.mxu0 0.0
    %468 = vmatpush1.msra.mxu0 0.0
    %469 = vmatprep.subr.mxu0 0.0
    %470 = vmatpush1.msra.mxu0 0.0
    %471 = vmatprep.subr.mxu0 0.0
    %472 = vmatpush1.msra.mxu0 0.0
    %473 = vmatprep.subr.mxu0 0.0
    %474 = vmatpush1.msra.mxu0 0.0
    %475 = vmatprep.subr.mxu0 0.0
    %476 = vmatpush1.msra.mxu0 0.0
    %477 = vmatprep.subr.mxu0 0.0
    %478 = vmatpush1.msra.mxu0 0.0
    %479 = vmatprep.subr.mxu0 0.0
    %480 = vmatpush1.msra.mxu0 0.0
    %481 = vmatprep.subr.mxu0 0.0
    %482 = vmatpush1.msra.mxu0 0.0
    %483 = vmatprep.subr.mxu0 0.0
    %484 = vmatpush1.msra.mxu0 0.0
    %485 = vmatprep.subr.mxu0 0.0
    %486 = vmatpush1.msra.mxu0 0.0
    %487 = vmatprep.subr.mxu0 0.0
    %488 = vmatpush1.msra.mxu0 0.0
    %489 = vmatprep.subr.mxu0 0.0
    %490 = vmatpush1.msra.mxu0 0.0
    %491 = vmatprep.mubr.f32.mxu0 0.0
    %492 = vmatmul.mubr.f32.gmra.mrb[0].mxu0 %v425
    %v493 = vpop.f32.mrb[0].mxu0
    %v494 = vadd.f32 0.0, %v493
    %v495 = vpop.f32.mrb[0].mxu0
    %496 = vdwg.mxu0
    %v497 = vadd.f32 %v335, %v418
    %v498 = vadd.f32 %v336, %v494
    %v499 = vrcp.pop %v343
    %v500 = vrcp.pop %v344
    %v501 = vmul.f32 %v497, %v499
    %v502 = vmul.f32 %v498, %v500
    %503 = vrot.lane.b32.xlu0 %v139, 120
    %v504 = vpop.permute.xlu0 %503
    %505 = vrot.lane.b32.xlu0 %v139, 88
    %v506 = vpop.permute.xlu0 %505
    %v507 = vsel %vm159, %v504, 0
    %v509 = vsel %vm159, %v506, 0
    %511 = vmatprep.subr.mxu0 0.0
    %512 = vmatpush1.xpose.msra.mxu0 %v509
    %513 = vmatprep.subr.mxu0 0.0
    %514 = vmatpush1.xpose.msra.mxu0 0.0
    %515 = vmatprep.subr.mxu0 0.0
    %516 = vmatpush1.xpose.msra.mxu0 0.0
    %517 = vmatprep.subr.mxu0 0.0
    %518 = vmatpush1.xpose.msra.mxu0 0.0
    %519 = vmatprep.subr.mxu0 0.0
    %520 = vmatpush1.xpose.msra.mxu0 0.0
    %521 = vmatprep.subr.mxu0 0.0
    %522 = vmatpush1.xpose.msra.mxu0 0.0
    %523 = vmatprep.subr.mxu0 0.0
    %524 = vmatpush1.xpose.msra.mxu0 0.0
    %525 = vmatprep.subr.mxu0 0.0
    %526 = vmatpush1.xpose.msra.mxu0 0.0
    %527 = vmatprep.subr.mxu0 0.0
    %528 = vmatpush1.xpose.msra.mxu0 0.0
    %529 = vmatprep.subr.mxu0 0.0
    %530 = vmatpush1.xpose.msra.mxu0 0.0
    %531 = vmatprep.subr.mxu0 0.0
    %532 = vmatpush1.xpose.msra.mxu0 0.0
    %533 = vmatprep.subr.mxu0 0.0
    %534 = vmatpush1.xpose.msra.mxu0 0.0
    %535 = vmatprep.subr.mxu0 0.0
    %536 = vmatpush1.xpose.msra.mxu0 0.0
    %537 = vmatprep.subr.mxu0 0.0
    %538 = vmatpush1.xpose.msra.mxu0 0.0
    %539 = vmatprep.subr.mxu0 0.0
    %540 = vmatpush1.xpose.msra.mxu0 0.0
    %541 = vmatprep.subr.mxu0 0.0
    %542 = vmatpush1.xpose.msra.mxu0 0.0
    %543 = vmatprep.subr.mxu0 0.0
    %544 = vmatpush1.xpose.msra.mxu0 0.0
    %545 = vmatprep.subr.mxu0 0.0
    %546 = vmatpush1.xpose.msra.mxu0 0.0
    %547 = vmatprep.subr.mxu0 0.0
    %548 = vmatpush1.xpose.msra.mxu0 0.0
    %549 = vmatprep.subr.mxu0 0.0
    %550 = vmatpush1.xpose.msra.mxu0 0.0
    %551 = vmatprep.subr.mxu0 0.0
    %552 = vmatpush1.xpose.msra.mxu0 0.0
    %553 = vmatprep.subr.mxu0 0.0
    %554 = vmatpush1.xpose.msra.mxu0 0.0
    %555 = vmatprep.subr.mxu0 0.0
    %556 = vmatpush1.xpose.msra.mxu0 0.0
    %557 = vmatprep.subr.mxu0 0.0
    %558 = vmatpush1.xpose.msra.mxu0 0.0
    %559 = vmatprep.subr.mxu0 0.0
    %560 = vmatpush1.xpose.msra.mxu0 0.0
    %561 = vmatprep.subr.mxu0 0.0
    %562 = vmatpush1.xpose.msra.mxu0 0.0
    %563 = vmatprep.subr.mxu0 0.0
    %564 = vmatpush1.xpose.msra.mxu0 0.0
    %565 = vmatprep.subr.mxu0 0.0
    %566 = vmatpush1.xpose.msra.mxu0 0.0
    %567 = vmatprep.subr.mxu0 0.0
    %568 = vmatpush1.xpose.msra.mxu0 0.0
    %569 = vmatprep.subr.mxu0 0.0
    %570 = vmatpush1.xpose.msra.mxu0 0.0
    %571 = vmatprep.subr.mxu0 0.0
    %572 = vmatpush1.xpose.msra.mxu0 0.0
    %573 = vmatprep.subr.mxu0 0.0
    %574 = vmatpush1.xpose.msra.mxu0 0.0
    %575 = vmatprep.mubr.f32.mxu0 0.0
    %576 = vmatmul.mubr.f32.gmra.mrb[0].mxu0 %v507
    %v577 = vpop.f32.mrb[0].mxu0
    %v578 = vadd.f32 0.0, %v577
    %v579 = vpop.f32.mrb[0].mxu0
    %580 = vdwg.mxu0
    %581 = vrot.lane.b32.xlu0 %v144, 120
    %v582 = vpop.permute.xlu0 %581
    %583 = vrot.lane.b32.xlu0 %v144, 88
    %v584 = vpop.permute.xlu0 %583
    %v585 = vsel %vm159, %v582, 0
    %v587 = vsel %vm159, %v584, 0
    %589 = vmatprep.subr.mxu0 0.0
    %590 = vmatpush1.xpose.msra.mxu0 %v587
    %591 = vmatprep.subr.mxu0 0.0
    %592 = vmatpush1.xpose.msra.mxu0 0.0
    %593 = vmatprep.subr.mxu0 0.0
    %594 = vmatpush1.xpose.msra.mxu0 0.0
    %595 = vmatprep.subr.mxu0 0.0
    %596 = vmatpush1.xpose.msra.mxu0 0.0
    %597 = vmatprep.subr.mxu0 0.0
    %598 = vmatpush1.xpose.msra.mxu0 0.0
    %599 = vmatprep.subr.mxu0 0.0
    %600 = vmatpush1.xpose.msra.mxu0 0.0
    %601 = vmatprep.subr.mxu0 0.0
    %602 = vmatpush1.xpose.msra.mxu0 0.0
    %603 = vmatprep.subr.mxu0 0.0
    %604 = vmatpush1.xpose.msra.mxu0 0.0
    %605 = vmatprep.subr.mxu0 0.0
    %606 = vmatpush1.xpose.msra.mxu0 0.0
    %607 = vmatprep.subr.mxu0 0.0
    %608 = vmatpush1.xpose.msra.mxu0 0.0
    %609 = vmatprep.subr.mxu0 0.0
    %610 = vmatpush1.xpose.msra.mxu0 0.0
    %611 = vmatprep.subr.mxu0 0.0
    %612 = vmatpush1.xpose.msra.mxu0 0.0
    %613 = vmatprep.subr.mxu0 0.0
    %614 = vmatpush1.xpose.msra.mxu0 0.0
    %615 = vmatprep.subr.mxu0 0.0
    %616 = vmatpush1.xpose.msra.mxu0 0.0
    %617 = vmatprep.subr.mxu0 0.0
    %618 = vmatpush1.xpose.msra.mxu0 0.0
    %619 = vmatprep.subr.mxu0 0.0
    %620 = vmatpush1.xpose.msra.mxu0 0.0
    %621 = vmatprep.subr.mxu0 0.0
    %622 = vmatpush1.xpose.msra.mxu0 0.0
    %623 = vmatprep.subr.mxu0 0.0
    %624 = vmatpush1.xpose.msra.mxu0 0.0
    %625 = vmatprep.subr.mxu0 0.0
    %626 = vmatpush1.xpose.msra.mxu0 0.0
    %627 = vmatprep.subr.mxu0 0.0
    %628 = vmatpush1.xpose.msra.mxu0 0.0
    %629 = vmatprep.subr.mxu0 0.0
    %630 = vmatpush1.xpose.msra.mxu0 0.0
    %631 = vmatprep.subr.mxu0 0.0
    %632 = vmatpush1.xpose.msra.mxu0 0.0
    %633 = vmatprep.subr.mxu0 0.0
    %634 = vmatpush1.xpose.msra.mxu0 0.0
    %635 = vmatprep.subr.mxu0 0.0
    %636 = vmatpush1.xpose.msra.mxu0 0.0
    %637 = vmatprep.subr.mxu0 0.0
    %638 = vmatpush1.xpose.msra.mxu0 0.0
    %639 = vmatprep.subr.mxu0 0.0
    %640 = vmatpush1.xpose.msra.mxu0 0.0
    %641 = vmatprep.subr.mxu0 0.0
    %642 = vmatpush1.xpose.msra.mxu0 0.0
    %643 = vmatprep.subr.mxu0 0.0
    %644 = vmatpush1.xpose.msra.mxu0 0.0
    %645 = vmatprep.subr.mxu0 0.0
    %646 = vmatpush1.xpose.msra.mxu0 0.0
    %647 = vmatprep.subr.mxu0 0.0
    %648 = vmatpush1.xpose.msra.mxu0 0.0
    %649 = vmatprep.subr.mxu0 0.0
    %650 = vmatpush1.xpose.msra.mxu0 0.0
    %651 = vmatprep.subr.mxu0 0.0
    %652 = vmatpush1.xpose.msra.mxu0 0.0
    %653 = vmatprep.mubr.f32.mxu0 0.0
    %654 = vmatmul.mubr.f32.gmra.mrb[0].mxu0 %v585
    %v655 = vpop.f32.mrb[0].mxu0
    %v656 = vadd.f32 0.0, %v655
    %v657 = vpop.f32.mrb[0].mxu0
    %658 = vdwg.mxu0
    %v659 = vsel %vm312, %v578, -1e+30
    %v660 = vsel %vm312, %v656, -1e+30
    %v661 = vsel %vm159, %v659, -inf
    %662 = vmax.xlane.f32.xlu0 %v661
    %v663 = vpop.xlane.xlu0 %662
    %v664 = vsel %vm159, %v660, -inf
    %665 = vmax.xlane.f32.xlu0 %v664
    %v666 = vpop.xlane.xlu0 %665
    %v667 = vmax.f32 %v663, -1e+30
    %v668 = vmax.f32 %v666, -1e+30
    %v669 = vsub.f32 -1e+30, %v667
    %v670 = vsub.f32 -1e+30, %v668
    %v671 = vmul.f32 %v669, 1.442695
    %v672 = vpow.pop %v671
    %v673 = vmul.f32 %v670, 1.442695
    %v674 = vpow.pop %v673
    %v675 = vsub.f32 %v659, %v667
    %v676 = vsub.f32 %v660, %v668
    %v677 = vmul.f32 %v675, 1.442695
    %v678 = vpow.pop %v677
    %v679 = vmul.f32 %v676, 1.442695
    %v680 = vpow.pop %v679
    %v681 = vmul.f32 %v672, 0.0
    %v682 = vmul.f32 %v674, 0.0
    %v683 = vsel %vm159, %v678, 0.0
    %684 = vadd.xlane.f32.xlu0 %v683
    %v685 = vpop.xlane.xlu0 %684
    %v686 = vsel %vm159, %v680, 0.0
    %687 = vadd.xlane.f32.xlu0 %v686
    %v688 = vpop.xlane.xlu0 %687
    %v689 = vadd.f32 %v681, %v685
    %v690 = vadd.f32 %v682, %v688
    %691 = vrot.lane.b32.xlu0 %v139, 56
    %v692 = vpop.permute.xlu0 %691
    %v695 = vsel %vm159, %v678, 0
    %697 = vmatprep.subr.mxu0 0.0
    %698 = vmatpush1.msra.mxu0 %v692
    %699 = vmatprep.subr.mxu0 0.0
    %700 = vmatpush1.msra.mxu0 0.0
    %701 = vmatprep.subr.mxu0 0.0
    %702 = vmatpush1.msra.mxu0 0.0
    %703 = vmatprep.subr.mxu0 0.0
    %704 = vmatpush1.msra.mxu0 0.0
    %705 = vmatprep.subr.mxu0 0.0
    %706 = vmatpush1.msra.mxu0 0.0
    %707 = vmatprep.subr.mxu0 0.0
    %708 = vmatpush1.msra.mxu0 0.0
    %709 = vmatprep.subr.mxu0 0.0
    %710 = vmatpush1.msra.mxu0 0.0
    %711 = vmatprep.subr.mxu0 0.0
    %712 = vmatpush1.msra.mxu0 0.0
    %713 = vmatprep.subr.mxu0 0.0
    %714 = vmatpush1.msra.mxu0 0.0
    %715 = vmatprep.subr.mxu0 0.0
    %716 = vmatpush1.msra.mxu0 0.0
    %717 = vmatprep.subr.mxu0 0.0
    %718 = vmatpush1.msra.mxu0 0.0
    %719 = vmatprep.subr.mxu0 0.0
    %720 = vmatpush1.msra.mxu0 0.0
    %721 = vmatprep.subr.mxu0 0.0
    %722 = vmatpush1.msra.mxu0 0.0
    %723 = vmatprep.subr.mxu0 0.0
    %724 = vmatpush1.msra.mxu0 0.0
    %725 = vmatprep.subr.mxu0 0.0
    %726 = vmatpush1.msra.mxu0 0.0
    %727 = vmatprep.subr.mxu0 0.0
    %728 = vmatpush1.msra.mxu0 0.0
    %729 = vmatprep.subr.mxu0 0.0
    %730 = vmatpush1.msra.mxu0 0.0
    %731 = vmatprep.subr.mxu0 0.0
    %732 = vmatpush1.msra.mxu0 0.0
    %733 = vmatprep.subr.mxu0 0.0
    %734 = vmatpush1.msra.mxu0 0.0
    %735 = vmatprep.subr.mxu0 0.0
    %736 = vmatpush1.msra.mxu0 0.0
    %737 = vmatprep.subr.mxu0 0.0
    %738 = vmatpush1.msra.mxu0 0.0
    %739 = vmatprep.subr.mxu0 0.0
    %740 = vmatpush1.msra.mxu0 0.0
    %741 = vmatprep.subr.mxu0 0.0
    %742 = vmatpush1.msra.mxu0 0.0
    %743 = vmatprep.subr.mxu0 0.0
    %744 = vmatpush1.msra.mxu0 0.0
    %745 = vmatprep.subr.mxu0 0.0
    %746 = vmatpush1.msra.mxu0 0.0
    %747 = vmatprep.subr.mxu0 0.0
    %748 = vmatpush1.msra.mxu0 0.0
    %749 = vmatprep.subr.mxu0 0.0
    %750 = vmatpush1.msra.mxu0 0.0
    %751 = vmatprep.subr.mxu0 0.0
    %752 = vmatpush1.msra.mxu0 0.0
    %753 = vmatprep.subr.mxu0 0.0
    %754 = vmatpush1.msra.mxu0 0.0
    %755 = vmatprep.subr.mxu0 0.0
    %756 = vmatpush1.msra.mxu0 0.0
    %757 = vmatprep.subr.mxu0 0.0
    %758 = vmatpush1.msra.mxu0 0.0
    %759 = vmatprep.subr.mxu0 0.0
    %760 = vmatpush1.msra.mxu0 0.0
    %761 = vmatprep.mubr.f32.mxu0 0.0
    %762 = vmatmul.mubr.f32.gmra.mrb[0].mxu0 %v695
    %v763 = vpop.f32.mrb[0].mxu0
    %v764 = vadd.f32 0.0, %v763
    %v765 = vpop.f32.mrb[0].mxu0
    %766 = vdwg.mxu0
    %767 = vrot.lane.b32.xlu0 %v144, 56
    %v768 = vpop.permute.xlu0 %767
    %v771 = vsel %vm159, %v680, 0
    %773 = vmatprep.subr.mxu0 0.0
    %774 = vmatpush1.msra.mxu0 %v768
    %775 = vmatprep.subr.mxu0 0.0
    %776 = vmatpush1.msra.mxu0 0.0
    %777 = vmatprep.subr.mxu0 0.0
    %778 = vmatpush1.msra.mxu0 0.0
    %779 = vmatprep.subr.mxu0 0.0
    %780 = vmatpush1.msra.mxu0 0.0
    %781 = vmatprep.subr.mxu0 0.0
    %782 = vmatpush1.msra.mxu0 0.0
    %783 = vmatprep.subr.mxu0 0.0
    %784 = vmatpush1.msra.mxu0 0.0
    %785 = vmatprep.subr.mxu0 0.0
    %786 = vmatpush1.msra.mxu0 0.0
    %787 = vmatprep.subr.mxu0 0.0
    %788 = vmatpush1.msra.mxu0 0.0
    %789 = vmatprep.subr.mxu0 0.0
    %790 = vmatpush1.msra.mxu0 0.0
    %791 = vmatprep.subr.mxu0 0.0
    %792 = vmatpush1.msra.mxu0 0.0
    %793 = vmatprep.subr.mxu0 0.0
    %794 = vmatpush1.msra.mxu0 0.0
    %795 = vmatprep.subr.mxu0 0.0
    %796 = vmatpush1.msra.mxu0 0.0
    %797 = vmatprep.subr.mxu0 0.0
    %798 = vmatpush1.msra.mxu0 0.0
    %799 = vmatprep.subr.mxu0 0.0
    %800 = vmatpush1.msra.mxu0 0.0
    %801 = vmatprep.subr.mxu0 0.0
    %802 = vmatpush1.msra.mxu0 0.0
    %803 = vmatprep.subr.mxu0 0.0
    %804 = vmatpush1.msra.mxu0 0.0
    %805 = vmatprep.subr.mxu0 0.0
    %806 = vmatpush1.msra.mxu0 0.0
    %807 = vmatprep.subr.mxu0 0.0
    %808 = vmatpush1.msra.mxu0 0.0
    %809 = vmatprep.subr.mxu0 0.0
    %810 = vmatpush1.msra.mxu0 0.0
    %811 = vmatprep.subr.mxu0 0.0
    %812 = vmatpush1.msra.mxu0 0.0
    %813 = vmatprep.subr.mxu0 0.0
    %814 = vmatpush1.msra.mxu0 0.0
    %815 = vmatprep.subr.mxu0 0.0
    %816 = vmatpush1.msra.mxu0 0.0
    %817 = vmatprep.subr.mxu0 0.0
    %818 = vmatpush1.msra.mxu0 0.0
    %819 = vmatprep.subr.mxu0 0.0
    %820 = vmatpush1.msra.mxu0 0.0
    %821 = vmatprep.subr.mxu0 0.0
    %822 = vmatpush1.msra.mxu0 0.0
    %823 = vmatprep.subr.mxu0 0.0
    %824 = vmatpush1.msra.mxu0 0.0
    %825 = vmatprep.subr.mxu0 0.0
    %826 = vmatpush1.msra.mxu0 0.0
    %827 = vmatprep.subr.mxu0 0.0
    %828 = vmatpush1.msra.mxu0 0.0
    %829 = vmatprep.subr.mxu0 0.0
    %830 = vmatpush1.msra.mxu0 0.0
    %831 = vmatprep.subr.mxu0 0.0
    %832 = vmatpush1.msra.mxu0 0.0
    %833 = vmatprep.subr.mxu0 0.0
    %834 = vmatpush1.msra.mxu0 0.0
    %835 = vmatprep.subr.mxu0 0.0
    %836 = vmatpush1.msra.mxu0 0.0
    %837 = vmatprep.mubr.f32.mxu0 0.0
    %838 = vmatmul.mubr.f32.gmra.mrb[0].mxu0 %v771
    %v839 = vpop.f32.mrb[0].mxu0
    %v840 = vadd.f32 0.0, %v839
    %v841 = vpop.f32.mrb[0].mxu0
    %842 = vdwg.mxu0
    %v843 = vadd.f32 %v681, %v764
    %v844 = vadd.f32 %v682, %v840
    %v845 = vrcp.pop %v689
    %v846 = vrcp.pop %v690
    %v847 = vmul.f32 %v843, %v845
    %v848 = vmul.f32 %v844, %v846
    %849 = vrot.lane.b32.xlu0 %v139, 112
    %v850 = vpop.permute.xlu0 %849
    %851 = vrot.lane.b32.xlu0 %v139, 80
    %v852 = vpop.permute.xlu0 %851
    %v853 = vsel %vm159, %v850, 0
    %v855 = vsel %vm159, %v852, 0
    %857 = vmatprep.subr.mxu0 0.0
    %858 = vmatpush1.xpose.msra.mxu0 %v855
    %859 = vmatprep.subr.mxu0 0.0
    %860 = vmatpush1.xpose.msra.mxu0 0.0
    %861 = vmatprep.subr.mxu0 0.0
    %862 = vmatpush1.xpose.msra.mxu0 0.0
    %863 = vmatprep.subr.mxu0 0.0
    %864 = vmatpush1.xpose.msra.mxu0 0.0
    %865 = vmatprep.subr.mxu0 0.0
    %866 = vmatpush1.xpose.msra.mxu0 0.0
    %867 = vmatprep.subr.mxu0 0.0
    %868 = vmatpush1.xpose.msra.mxu0 0.0
    %869 = vmatprep.subr.mxu0 0.0
    %870 = vmatpush1.xpose.msra.mxu0 0.0
    %871 = vmatprep.subr.mxu0 0.0
    %872 = vmatpush1.xpose.msra.mxu0 0.0
    %873 = vmatprep.subr.mxu0 0.0
    %874 = vmatpush1.xpose.msra.mxu0 0.0
    %875 = vmatprep.subr.mxu0 0.0
    %876 = vmatpush1.xpose.msra.mxu0 0.0
    %877 = vmatprep.subr.mxu0 0.0
    %878 = vmatpush1.xpose.msra.mxu0 0.0
    %879 = vmatprep.subr.mxu0 0.0
    %880 = vmatpush1.xpose.msra.mxu0 0.0
    %881 = vmatprep.subr.mxu0 0.0
    %882 = vmatpush1.xpose.msra.mxu0 0.0
    %883 = vmatprep.subr.mxu0 0.0
    %884 = vmatpush1.xpose.msra.mxu0 0.0
    %885 = vmatprep.subr.mxu0 0.0
    %886 = vmatpush1.xpose.msra.mxu0 0.0
    %887 = vmatprep.subr.mxu0 0.0
    %888 = vmatpush1.xpose.msra.mxu0 0.0
    %889 = vmatprep.subr.mxu0 0.0
    %890 = vmatpush1.xpose.msra.mxu0 0.0
    %891 = vmatprep.subr.mxu0 0.0
    %892 = vmatpush1.xpose.msra.mxu0 0.0
    %893 = vmatprep.subr.mxu0 0.0
    %894 = vmatpush1.xpose.msra.mxu0 0.0
    %895 = vmatprep.subr.mxu0 0.0
    %896 = vmatpush1.xpose.msra.mxu0 0.0
    %897 = vmatprep.subr.mxu0 0.0
    %898 = vmatpush1.xpose.msra.mxu0 0.0
    %899 = vmatprep.subr.mxu0 0.0
    %900 = vmatpush1.xpose.msra.mxu0 0.0
    %901 = vmatprep.subr.mxu0 0.0
    %902 = vmatpush1.xpose.msra.mxu0 0.0
    %903 = vmatprep.subr.mxu0 0.0
    %904 = vmatpush1.xpose.msra.mxu0 0.0
    %905 = vmatprep.subr.mxu0 0.0
    %906 = vmatpush1.xpose.msra.mxu0 0.0
    %907 = vmatprep.subr.mxu0 0.0
    %908 = vmatpush1.xpose.msra.mxu0 0.0
    %909 = vmatprep.subr.mxu0 0.0
    %910 = vmatpush1.xpose.msra.mxu0 0.0
    %911 = vmatprep.subr.mxu0 0.0
    %912 = vmatpush1.xpose.msra.mxu0 0.0
    %913 = vmatprep.subr.mxu0 0.0
    %914 = vmatpush1.xpose.msra.mxu0 0.0
    %915 = vmatprep.subr.mxu0 0.0
    %916 = vmatpush1.xpose.msra.mxu0 0.0
    %917 = vmatprep.subr.mxu0 0.0
    %918 = vmatpush1.xpose.msra.mxu0 0.0
    %919 = vmatprep.subr.mxu0 0.0
    %920 = vmatpush1.xpose.msra.mxu0 0.0
    %921 = vmatprep.mubr.f32.mxu0 0.0
    %922 = vmatmul.mubr.f32.gmra.mrb[0].mxu0 %v853
    %v923 = vpop.f32.mrb[0].mxu0
    %v924 = vadd.f32 0.0, %v923
    %v925 = vpop.f32.mrb[0].mxu0
    %926 = vdwg.mxu0
    %927 = vrot.lane.b32.xlu0 %v144, 112
    %v928 = vpop.permute.xlu0 %927
    %929 = vrot.lane.b32.xlu0 %v144, 80
    %v930 = vpop.permute.xlu0 %929
    %v931 = vsel %vm159, %v928, 0
    %v933 = vsel %vm159, %v930, 0
    %935 = vmatprep.subr.mxu0 0.0
    %936 = vmatpush1.xpose.msra.mxu0 %v933
    %937 = vmatprep.subr.mxu0 0.0
    %938 = vmatpush1.xpose.msra.mxu0 0.0
    %939 = vmatprep.subr.mxu0 0.0
    %940 = vmatpush1.xpose.msra.mxu0 0.0
    %941 = vmatprep.subr.mxu0 0.0
    %942 = vmatpush1.xpose.msra.mxu0 0.0
    %943 = vmatprep.subr.mxu0 0.0
    %944 = vmatpush1.xpose.msra.mxu0 0.0
    %945 = vmatprep.subr.mxu0 0.0
    %946 = vmatpush1.xpose.msra.mxu0 0.0
    %947 = vmatprep.subr.mxu0 0.0
    %948 = vmatpush1.xpose.msra.mxu0 0.0
    %949 = vmatprep.subr.mxu0 0.0
    %950 = vmatpush1.xpose.msra.mxu0 0.0
    %951 = vmatprep.subr.mxu0 0.0
    %952 = vmatpush1.xpose.msra.mxu0 0.0
    %953 = vmatprep.subr.mxu0 0.0
    %954 = vmatpush1.xpose.msra.mxu0 0.0
    %955 = vmatprep.subr.mxu0 0.0
    %956 = vmatpush1.xpose.msra.mxu0 0.0
    %957 = vmatprep.subr.mxu0 0.0
    %958 = vmatpush1.xpose.msra.mxu0 0.0
    %959 = vmatprep.subr.mxu0 0.0
    %960 = vmatpush1.xpose.msra.mxu0 0.0
    %961 = vmatprep.subr.mxu0 0.0
    %962 = vmatpush1.xpose.msra.mxu0 0.0
    %963 = vmatprep.subr.mxu0 0.0
    %964 = vmatpush1.xpose.msra.mxu0 0.0
    %965 = vmatprep.subr.mxu0 0.0
    %966 = vmatpush1.xpose.msra.mxu0 0.0
    %967 = vmatprep.subr.mxu0 0.0
    %968 = vmatpush1.xpose.msra.mxu0 0.0
    %969 = vmatprep.subr.mxu0 0.0
    %970 = vmatpush1.xpose.msra.mxu0 0.0
    %971 = vmatprep.subr.mxu0 0.0
    %972 = vmatpush1.xpose.msra.mxu0 0.0
    %973 = vmatprep.subr.mxu0 0.0
    %974 = vmatpush1.xpose.msra.mxu0 0.0
    %975 = vmatprep.subr.mxu0 0.0
    %976 = vmatpush1.xpose.msra.mxu0 0.0
    %977 = vmatprep.subr.mxu0 0.0
    %978 = vmatpush1.xpose.msra.mxu0 0.0
    %979 = vmatprep.subr.mxu0 0.0
    %980 = vmatpush1.xpose.msra.mxu0 0.0
    %981 = vmatprep.subr.mxu0 0.0
    %982 = vmatpush1.xpose.msra.mxu0 0.0
    %983 = vmatprep.subr.mxu0 0.0
    %984 = vmatpush1.xpose.msra.mxu0 0.0
    %985 = vmatprep.subr.mxu0 0.0
    %986 = vmatpush1.xpose.msra.mxu0 0.0
    %987 = vmatprep.subr.mxu0 0.0
    %988 = vmatpush1.xpose.msra.mxu0 0.0
    %989 = vmatprep.subr.mxu0 0.0
    %990 = vmatpush1.xpose.msra.mxu0 0.0
    %991 = vmatprep.subr.mxu0 0.0
    %992 = vmatpush1.xpose.msra.mxu0 0.0
    %993 = vmatprep.subr.mxu0 0.0
    %994 = vmatpush1.xpose.msra.mxu0 0.0
    %995 = vmatprep.subr.mxu0 0.0
    %996 = vmatpush1.xpose.msra.mxu0 0.0
    %997 = vmatprep.subr.mxu0 0.0
    %998 = vmatpush1.xpose.msra.mxu0 0.0
    %999 = vmatprep.mubr.f32.mxu0 0.0
    %1000 = vmatmul.mubr.f32.gmra.mrb[0].mxu0 %v931
    %v1001 = vpop.f32.mrb[0].mxu0
    %v1002 = vadd.f32 0.0, %v1001
    %v1003 = vpop.f32.mrb[0].mxu0
    %1004 = vdwg.mxu0
    %v1005 = vsel %vm312, %v924, -1e+30
    %v1006 = vsel %vm312, %v1002, -1e+30
    %v1007 = vsel %vm159, %v1005, -inf
    %1008 = vmax.xlane.f32.xlu0 %v1007
    %v1009 = vpop.xlane.xlu0 %1008
    %v1010 = vsel %vm159, %v1006, -inf
    %1011 = vmax.xlane.f32.xlu0 %v1010
    %v1012 = vpop.xlane.xlu0 %1011
    %v1013 = vmax.f32 %v1009, -1e+30
    %v1014 = vmax.f32 %v1012, -1e+30
    %v1015 = vsub.f32 -1e+30, %v1013
    %v1016 = vsub.f32 -1e+30, %v1014
    %v1017 = vmul.f32 %v1015, 1.442695
    %v1018 = vpow.pop %v1017
    %v1019 = vmul.f32 %v1016, 1.442695
    %v1020 = vpow.pop %v1019
    %v1021 = vsub.f32 %v1005, %v1013
    %v1022 = vsub.f32 %v1006, %v1014
    %v1023 = vmul.f32 %v1021, 1.442695
    %v1024 = vpow.pop %v1023
    %v1025 = vmul.f32 %v1022, 1.442695
    %v1026 = vpow.pop %v1025
    %v1027 = vmul.f32 %v1018, 0.0
    %v1028 = vmul.f32 %v1020, 0.0
    %v1029 = vsel %vm159, %v1024, 0.0
    %1030 = vadd.xlane.f32.xlu0 %v1029
    %v1031 = vpop.xlane.xlu0 %1030
    %v1032 = vsel %vm159, %v1026, 0.0
    %1033 = vadd.xlane.f32.xlu0 %v1032
    %v1034 = vpop.xlane.xlu0 %1033
    %v1035 = vadd.f32 %v1027, %v1031
    %v1036 = vadd.f32 %v1028, %v1034
    %1037 = vrot.lane.b32.xlu0 %v139, 48
    %v1038 = vpop.permute.xlu0 %1037
    %v1041 = vsel %vm159, %v1024, 0
    %1043 = vmatprep.subr.mxu0 0.0
    %1044 = vmatpush1.msra.mxu0 %v1038
    %1045 = vmatprep.subr.mxu0 0.0
    %1046 = vmatpush1.msra.mxu0 0.0
    %1047 = vmatprep.subr.mxu0 0.0
    %1048 = vmatpush1.msra.mxu0 0.0
    %1049 = vmatprep.subr.mxu0 0.0
    %1050 = vmatpush1.msra.mxu0 0.0
    %1051 = vmatprep.subr.mxu0 0.0
    %1052 = vmatpush1.msra.mxu0 0.0
    %1053 = vmatprep.subr.mxu0 0.0
    %1054 = vmatpush1.msra.mxu0 0.0
    %1055 = vmatprep.subr.mxu0 0.0
    %1056 = vmatpush1.msra.mxu0 0.0
    %1057 = vmatprep.subr.mxu0 0.0
    %1058 = vmatpush1.msra.mxu0 0.0
    %1059 = vmatprep.subr.mxu0 0.0
    %1060 = vmatpush1.msra.mxu0 0.0
    %1061 = vmatprep.subr.mxu0 0.0
    %1062 = vmatpush1.msra.mxu0 0.0
    %1063 = vmatprep.subr.mxu0 0.0
    %1064 = vmatpush1.msra.mxu0 0.0
    %1065 = vmatprep.subr.mxu0 0.0
    %1066 = vmatpush1.msra.mxu0 0.0
    %1067 = vmatprep.subr.mxu0 0.0
    %1068 = vmatpush1.msra.mxu0 0.0
    %1069 = vmatprep.subr.mxu0 0.0
    %1070 = vmatpush1.msra.mxu0 0.0
    %1071 = vmatprep.subr.mxu0 0.0
    %1072 = vmatpush1.msra.mxu0 0.0
    %1073 = vmatprep.subr.mxu0 0.0
    %1074 = vmatpush1.msra.mxu0 0.0
    %1075 = vmatprep.subr.mxu0 0.0
    %1076 = vmatpush1.msra.mxu0 0.0
    %1077 = vmatprep.subr.mxu0 0.0
    %1078 = vmatpush1.msra.mxu0 0.0
    %1079 = vmatprep.subr.mxu0 0.0
    %1080 = vmatpush1.msra.mxu0 0.0
    %1081 = vmatprep.subr.mxu0 0.0
    %1082 = vmatpush1.msra.mxu0 0.0
    %1083 = vmatprep.subr.mxu0 0.0
    %1084 = vmatpush1.msra.mxu0 0.0
    %1085 = vmatprep.subr.mxu0 0.0
    %1086 = vmatpush1.msra.mxu0 0.0
    %1087 = vmatprep.subr.mxu0 0.0
    %1088 = vmatpush1.msra.mxu0 0.0
    %1089 = vmatprep.subr.mxu0 0.0
    %1090 = vmatpush1.msra.mxu0 0.0
    %1091 = vmatprep.subr.mxu0 0.0
    %1092 = vmatpush1.msra.mxu0 0.0
    %1093 = vmatprep.subr.mxu0 0.0
    %1094 = vmatpush1.msra.mxu0 0.0
    %1095 = vmatprep.subr.mxu0 0.0
    %1096 = vmatpush1.msra.mxu0 0.0
    %1097 = vmatprep.subr.mxu0 0.0
    %1098 = vmatpush1.msra.mxu0 0.0
    %1099 = vmatprep.subr.mxu0 0.0
    %1100 = vmatpush1.msra.mxu0 0.0
    %1101 = vmatprep.subr.mxu0 0.0
    %1102 = vmatpush1.msra.mxu0 0.0
    %1103 = vmatprep.subr.mxu0 0.0
    %1104 = vmatpush1.msra.mxu0 0.0
    %1105 = vmatprep.subr.mxu0 0.0
    %1106 = vmatpush1.msra.mxu0 0.0
    %1107 = vmatprep.mubr.f32.mxu0 0.0
    %1108 = vmatmul.mubr.f32.gmra.mrb[0].mxu0 %v1041
    %v1109 = vpop.f32.mrb[0].mxu0
    %v1110 = vadd.f32 0.0, %v1109
    %v1111 = vpop.f32.mrb[0].mxu0
    %1112 = vdwg.mxu0
    %1113 = vrot.lane.b32.xlu0 %v144, 48
    %v1114 = vpop.permute.xlu0 %1113
    %v1117 = vsel %vm159, %v1026, 0
    %1119 = vmatprep.subr.mxu0 0.0
    %1120 = vmatpush1.msra.mxu0 %v1114
    %1121 = vmatprep.subr.mxu0 0.0
    %1122 = vmatpush1.msra.mxu0 0.0
    %1123 = vmatprep.subr.mxu0 0.0
    %1124 = vmatpush1.msra.mxu0 0.0
    %1125 = vmatprep.subr.mxu0 0.0
    %1126 = vmatpush1.msra.mxu0 0.0
    %1127 = vmatprep.subr.mxu0 0.0
    %1128 = vmatpush1.msra.mxu0 0.0
    %1129 = vmatprep.subr.mxu0 0.0
    %1130 = vmatpush1.msra.mxu0 0.0
    %1131 = vmatprep.subr.mxu0 0.0
    %1132 = vmatpush1.msra.mxu0 0.0
    %1133 = vmatprep.subr.mxu0 0.0
    %1134 = vmatpush1.msra.mxu0 0.0
    %1135 = vmatprep.subr.mxu0 0.0
    %1136 = vmatpush1.msra.mxu0 0.0
    %1137 = vmatprep.subr.mxu0 0.0
    %1138 = vmatpush1.msra.mxu0 0.0
    %1139 = vmatprep.subr.mxu0 0.0
    %1140 = vmatpush1.msra.mxu0 0.0
    %1141 = vmatprep.subr.mxu0 0.0
    %1142 = vmatpush1.msra.mxu0 0.0
    %1143 = vmatprep.subr.mxu0 0.0
    %1144 = vmatpush1.msra.mxu0 0.0
    %1145 = vmatprep.subr.mxu0 0.0
    %1146 = vmatpush1.msra.mxu0 0.0
    %1147 = vmatprep.subr.mxu0 0.0
    %1148 = vmatpush1.msra.mxu0 0.0
    %1149 = vmatprep.subr.mxu0 0.0
    %1150 = vmatpush1.msra.mxu0 0.0
    %1151 = vmatprep.subr.mxu0 0.0
    %1152 = vmatpush1.msra.mxu0 0.0
    %1153 = vmatprep.subr.mxu0 0.0
    %1154 = vmatpush1.msra.mxu0 0.0
    %1155 = vmatprep.subr.mxu0 0.0
    %1156 = vmatpush1.msra.mxu0 0.0
    %1157 = vmatprep.subr.mxu0 0.0
    %1158 = vmatpush1.msra.mxu0 0.0
    %1159 = vmatprep.subr.mxu0 0.0
    %1160 = vmatpush1.msra.mxu0 0.0
    %1161 = vmatprep.subr.mxu0 0.0
    %1162 = vmatpush1.msra.mxu0 0.0
    %1163 = vmatprep.subr.mxu0 0.0
    %1164 = vmatpush1.msra.mxu0 0.0
    %1165 = vmatprep.subr.mxu0 0.0
    %1166 = vmatpush1.msra.mxu0 0.0
    %1167 = vmatprep.subr.mxu0 0.0
    %1168 = vmatpush1.msra.mxu0 0.0
    %1169 = vmatprep.subr.mxu0 0.0
    %1170 = vmatpush1.msra.mxu0 0.0
    %1171 = vmatprep.subr.mxu0 0.0
    %1172 = vmatpush1.msra.mxu0 0.0
    %1173 = vmatprep.subr.mxu0 0.0
    %1174 = vmatpush1.msra.mxu0 0.0
    %1175 = vmatprep.subr.mxu0 0.0
    %1176 = vmatpush1.msra.mxu0 0.0
    %1177 = vmatprep.subr.mxu0 0.0
    %1178 = vmatpush1.msra.mxu0 0.0
    %1179 = vmatprep.subr.mxu0 0.0
    %1180 = vmatpush1.msra.mxu0 0.0
    %1181 = vmatprep.subr.mxu0 0.0
    %1182 = vmatpush1.msra.mxu0 0.0
    %1183 = vmatprep.mubr.f32.mxu0 0.0
    %1184 = vmatmul.mubr.f32.gmra.mrb[0].mxu0 %v1117
    %v1185 = vpop.f32.mrb[0].mxu0
    %v1186 = vadd.f32 0.0, %v1185
    %v1187 = vpop.f32.mrb[0].mxu0
    %1188 = vdwg.mxu0
    %v1189 = vadd.f32 %v1027, %v1110
    %v1190 = vadd.f32 %v1028, %v1186
    %v1191 = vrcp.pop %v1035
    %v1192 = vrcp.pop %v1036
    %v1193 = vmul.f32 %v1189, %v1191
    %v1194 = vmul.f32 %v1190, %v1192
    %1195 = vrot.lane.b32.xlu0 %v139, 104
    %v1196 = vpop.permute.xlu0 %1195
    %1197 = vrot.lane.b32.xlu0 %v139, 72
    %v1198 = vpop.permute.xlu0 %1197
    %v1199 = vsel %vm159, %v1196, 0
    %v1201 = vsel %vm159, %v1198, 0
    %1203 = vmatprep.subr.mxu0 0.0
    %1204 = vmatpush1.xpose.msra.mxu0 %v1201
    %1205 = vmatprep.subr.mxu0 0.0
    %1206 = vmatpush1.xpose.msra.mxu0 0.0
    %1207 = vmatprep.subr.mxu0 0.0
    %1208 = vmatpush1.xpose.msra.mxu0 0.0
    %1209 = vmatprep.subr.mxu0 0.0
    %1210 = vmatpush1.xpose.msra.mxu0 0.0
    %1211 = vmatprep.subr.mxu0 0.0
    %1212 = vmatpush1.xpose.msra.mxu0 0.0
    %1213 = vmatprep.subr.mxu0 0.0
    %1214 = vmatpush1.xpose.msra.mxu0 0.0
    %1215 = vmatprep.subr.mxu0 0.0
    %1216 = vmatpush1.xpose.msra.mxu0 0.0
    %1217 = vmatprep.subr.mxu0 0.0
    %1218 = vmatpush1.xpose.msra.mxu0 0.0
    %1219 = vmatprep.subr.mxu0 0.0
    %1220 = vmatpush1.xpose.msra.mxu0 0.0
    %1221 = vmatprep.subr.mxu0 0.0
    %1222 = vmatpush1.xpose.msra.mxu0 0.0
    %1223 = vmatprep.subr.mxu0 0.0
    %1224 = vmatpush1.xpose.msra.mxu0 0.0
    %1225 = vmatprep.subr.mxu0 0.0
    %1226 = vmatpush1.xpose.msra.mxu0 0.0
    %1227 = vmatprep.subr.mxu0 0.0
    %1228 = vmatpush1.xpose.msra.mxu0 0.0
    %1229 = vmatprep.subr.mxu0 0.0
    %1230 = vmatpush1.xpose.msra.mxu0 0.0
    %1231 = vmatprep.subr.mxu0 0.0
    %1232 = vmatpush1.xpose.msra.mxu0 0.0
    %1233 = vmatprep.subr.mxu0 0.0
    %1234 = vmatpush1.xpose.msra.mxu0 0.0
    %1235 = vmatprep.subr.mxu0 0.0
    %1236 = vmatpush1.xpose.msra.mxu0 0.0
    %1237 = vmatprep.subr.mxu0 0.0
    %1238 = vmatpush1.xpose.msra.mxu0 0.0
    %1239 = vmatprep.subr.mxu0 0.0
    %1240 = vmatpush1.xpose.msra.mxu0 0.0
    %1241 = vmatprep.subr.mxu0 0.0
    %1242 = vmatpush1.xpose.msra.mxu0 0.0
    %1243 = vmatprep.subr.mxu0 0.0
    %1244 = vmatpush1.xpose.msra.mxu0 0.0
    %1245 = vmatprep.subr.mxu0 0.0
    %1246 = vmatpush1.xpose.msra.mxu0 0.0
    %1247 = vmatprep.subr.mxu0 0.0
    %1248 = vmatpush1.xpose.msra.mxu0 0.0
    %1249 = vmatprep.subr.mxu0 0.0
    %1250 = vmatpush1.xpose.msra.mxu0 0.0
    %1251 = vmatprep.subr.mxu0 0.0
    %1252 = vmatpush1.xpose.msra.mxu0 0.0
    %1253 = vmatprep.subr.mxu0 0.0
    %1254 = vmatpush1.xpose.msra.mxu0 0.0
    %1255 = vmatprep.subr.mxu0 0.0
    %1256 = vmatpush1.xpose.msra.mxu0 0.0
    %1257 = vmatprep.subr.mxu0 0.0
    %1258 = vmatpush1.xpose.msra.mxu0 0.0
    %1259 = vmatprep.subr.mxu0 0.0
    %1260 = vmatpush1.xpose.msra.mxu0 0.0
    %1261 = vmatprep.subr.mxu0 0.0
    %1262 = vmatpush1.xpose.msra.mxu0 0.0
    %1263 = vmatprep.subr.mxu0 0.0
    %1264 = vmatpush1.xpose.msra.mxu0 0.0
    %1265 = vmatprep.subr.mxu0 0.0
    %1266 = vmatpush1.xpose.msra.mxu0 0.0
    %1267 = vmatprep.mubr.f32.mxu0 0.0
    %1268 = vmatmul.mubr.f32.gmra.mrb[0].mxu0 %v1199
    %v1269 = vpop.f32.mrb[0].mxu0
    %v1270 = vadd.f32 0.0, %v1269
    %v1271 = vpop.f32.mrb[0].mxu0
    %1272 = vdwg.mxu0
    %1273 = vrot.lane.b32.xlu0 %v144, 104
    %v1274 = vpop.permute.xlu0 %1273
    %1275 = vrot.lane.b32.xlu0 %v144, 72
    %v1276 = vpop.permute.xlu0 %1275
    %v1277 = vsel %vm159, %v1274, 0
    %v1279 = vsel %vm159, %v1276, 0
    %1281 = vmatprep.subr.mxu0 0.0
    %1282 = vmatpush1.xpose.msra.mxu0 %v1279
    %1283 = vmatprep.subr.mxu0 0.0
    %1284 = vmatpush1.xpose.msra.mxu0 0.0
    %1285 = vmatprep.subr.mxu0 0.0
    %1286 = vmatpush1.xpose.msra.mxu0 0.0
    %1287 = vmatprep.subr.mxu0 0.0
    %1288 = vmatpush1.xpose.msra.mxu0 0.0
    %1289 = vmatprep.subr.mxu0 0.0
    %1290 = vmatpush1.xpose.msra.mxu0 0.0
    %1291 = vmatprep.subr.mxu0 0.0
    %1292 = vmatpush1.xpose.msra.mxu0 0.0
    %1293 = vmatprep.subr.mxu0 0.0
    %1294 = vmatpush1.xpose.msra.mxu0 0.0
    %1295 = vmatprep.subr.mxu0 0.0
    %1296 = vmatpush1.xpose.msra.mxu0 0.0
    %1297 = vmatprep.subr.mxu0 0.0
    %1298 = vmatpush1.xpose.msra.mxu0 0.0
    %1299 = vmatprep.subr.mxu0 0.0
    %1300 = vmatpush1.xpose.msra.mxu0 0.0
    %1301 = vmatprep.subr.mxu0 0.0
    %1302 = vmatpush1.xpose.msra.mxu0 0.0
    %1303 = vmatprep.subr.mxu0 0.0
    %1304 = vmatpush1.xpose.msra.mxu0 0.0
    %1305 = vmatprep.subr.mxu0 0.0
    %1306 = vmatpush1.xpose.msra.mxu0 0.0
    %1307 = vmatprep.subr.mxu0 0.0
    %1308 = vmatpush1.xpose.msra.mxu0 0.0
    %1309 = vmatprep.subr.mxu0 0.0
    %1310 = vmatpush1.xpose.msra.mxu0 0.0
    %1311 = vmatprep.subr.mxu0 0.0
    %1312 = vmatpush1.xpose.msra.mxu0 0.0
    %1313 = vmatprep.subr.mxu0 0.0
    %1314 = vmatpush1.xpose.msra.mxu0 0.0
    %1315 = vmatprep.subr.mxu0 0.0
    %1316 = vmatpush1.xpose.msra.mxu0 0.0
    %1317 = vmatprep.subr.mxu0 0.0
    %1318 = vmatpush1.xpose.msra.mxu0 0.0
    %1319 = vmatprep.subr.mxu0 0.0
    %1320 = vmatpush1.xpose.msra.mxu0 0.0
    %1321 = vmatprep.subr.mxu0 0.0
    %1322 = vmatpush1.xpose.msra.mxu0 0.0
    %1323 = vmatprep.subr.mxu0 0.0
    %1324 = vmatpush1.xpose.msra.mxu0 0.0
    %1325 = vmatprep.subr.mxu0 0.0
    %1326 = vmatpush1.xpose.msra.mxu0 0.0
    %1327 = vmatprep.subr.mxu0 0.0
    %1328 = vmatpush1.xpose.msra.mxu0 0.0
    %1329 = vmatprep.subr.mxu0 0.0
    %1330 = vmatpush1.xpose.msra.mxu0 0.0
    %1331 = vmatprep.subr.mxu0 0.0
    %1332 = vmatpush1.xpose.msra.mxu0 0.0
    %1333 = vmatprep.subr.mxu0 0.0
    %1334 = vmatpush1.xpose.msra.mxu0 0.0
    %1335 = vmatprep.subr.mxu0 0.0
    %1336 = vmatpush1.xpose.msra.mxu0 0.0
    %1337 = vmatprep.subr.mxu0 0.0
    %1338 = vmatpush1.xpose.msra.mxu0 0.0
    %1339 = vmatprep.subr.mxu0 0.0
    %1340 = vmatpush1.xpose.msra.mxu0 0.0
    %1341 = vmatprep.subr.mxu0 0.0
    %1342 = vmatpush1.xpose.msra.mxu0 0.0
    %1343 = vmatprep.subr.mxu0 0.0
    %1344 = vmatpush1.xpose.msra.mxu0 0.0
    %1345 = vmatprep.mubr.f32.mxu0 0.0
    %1346 = vmatmul.mubr.f32.gmra.mrb[0].mxu0 %v1277
    %v1347 = vpop.f32.mrb[0].mxu0
    %v1348 = vadd.f32 0.0, %v1347
    %v1349 = vpop.f32.mrb[0].mxu0
    %1350 = vdwg.mxu0
    %v1351 = vsel %vm312, %v1270, -1e+30
    %v1352 = vsel %vm312, %v1348, -1e+30
    %v1353 = vsel %vm159, %v1351, -inf
    %1354 = vmax.xlane.f32.xlu0 %v1353
    %v1355 = vpop.xlane.xlu0 %1354
    %v1356 = vsel %vm159, %v1352, -inf
    %1357 = vmax.xlane.f32.xlu0 %v1356
    %v1358 = vpop.xlane.xlu0 %1357
    %v1359 = vmax.f32 %v1355, -1e+30
    %v1360 = vmax.f32 %v1358, -1e+30
    %v1361 = vsub.f32 -1e+30, %v1359
    %v1362 = vsub.f32 -1e+30, %v1360
    %v1363 = vmul.f32 %v1361, 1.442695
    %v1364 = vpow.pop %v1363
    %v1365 = vmul.f32 %v1362, 1.442695
    %v1366 = vpow.pop %v1365
    %v1367 = vsub.f32 %v1351, %v1359
    %v1368 = vsub.f32 %v1352, %v1360
    %v1369 = vmul.f32 %v1367, 1.442695
    %v1370 = vpow.pop %v1369
    %v1371 = vmul.f32 %v1368, 1.442695
    %v1372 = vpow.pop %v1371
    %v1373 = vmul.f32 %v1364, 0.0
    %v1374 = vmul.f32 %v1366, 0.0
    %v1375 = vsel %vm159, %v1370, 0.0
    %1376 = vadd.xlane.f32.xlu0 %v1375
    %v1377 = vpop.xlane.xlu0 %1376
    %v1378 = vsel %vm159, %v1372, 0.0
    %1379 = vadd.xlane.f32.xlu0 %v1378
    %v1380 = vpop.xlane.xlu0 %1379
    %v1381 = vadd.f32 %v1373, %v1377
    %v1382 = vadd.f32 %v1374, %v1380
    %1383 = vrot.lane.b32.xlu0 %v139, 40
    %v1384 = vpop.permute.xlu0 %1383
    %v1387 = vsel %vm159, %v1370, 0
    %1389 = vmatprep.subr.mxu0 0.0
    %1390 = vmatpush1.msra.mxu0 %v1384
    %1391 = vmatprep.subr.mxu0 0.0
    %1392 = vmatpush1.msra.mxu0 0.0
    %1393 = vmatprep.subr.mxu0 0.0
    %1394 = vmatpush1.msra.mxu0 0.0
    %1395 = vmatprep.subr.mxu0 0.0
    %1396 = vmatpush1.msra.mxu0 0.0
    %1397 = vmatprep.subr.mxu0 0.0
    %1398 = vmatpush1.msra.mxu0 0.0
    %1399 = vmatprep.subr.mxu0 0.0
    %1400 = vmatpush1.msra.mxu0 0.0
    %1401 = vmatprep.subr.mxu0 0.0
    %1402 = vmatpush1.msra.mxu0 0.0
    %1403 = vmatprep.subr.mxu0 0.0
    %1404 = vmatpush1.msra.mxu0 0.0
    %1405 = vmatprep.subr.mxu0 0.0
    %1406 = vmatpush1.msra.mxu0 0.0
    %1407 = vmatprep.subr.mxu0 0.0
    %1408 = vmatpush1.msra.mxu0 0.0
    %1409 = vmatprep.subr.mxu0 0.0
    %1410 = vmatpush1.msra.mxu0 0.0
    %1411 = vmatprep.subr.mxu0 0.0
    %1412 = vmatpush1.msra.mxu0 0.0
    %1413 = vmatprep.subr.mxu0 0.0
    %1414 = vmatpush1.msra.mxu0 0.0
    %1415 = vmatprep.subr.mxu0 0.0
    %1416 = vmatpush1.msra.mxu0 0.0
    %1417 = vmatprep.subr.mxu0 0.0
    %1418 = vmatpush1.msra.mxu0 0.0
    %1419 = vmatprep.subr.mxu0 0.0
    %1420 = vmatpush1.msra.mxu0 0.0
    %1421 = vmatprep.subr.mxu0 0.0
    %1422 = vmatpush1.msra.mxu0 0.0
    %1423 = vmatprep.subr.mxu0 0.0
    %1424 = vmatpush1.msra.mxu0 0.0
    %1425 = vmatprep.subr.mxu0 0.0
    %1426 = vmatpush1.msra.mxu0 0.0
    %1427 = vmatprep.subr.mxu0 0.0
    %1428 = vmatpush1.msra.mxu0 0.0
    %1429 = vmatprep.subr.mxu0 0.0
    %1430 = vmatpush1.msra.mxu0 0.0
    %1431 = vmatprep.subr.mxu0 0.0
    %1432 = vmatpush1.msra.mxu0 0.0
    %1433 = vmatprep.subr.mxu0 0.0
    %1434 = vmatpush1.msra.mxu0 0.0
    %1435 = vmatprep.subr.mxu0 0.0
    %1436 = vmatpush1.msra.mxu0 0.0
    %1437 = vmatprep.subr.mxu0 0.0
    %1438 = vmatpush1.msra.mxu0 0.0
    %1439 = vmatprep.subr.mxu0 0.0
    %1440 = vmatpush1.msra.mxu0 0.0
    %1441 = vmatprep.subr.mxu0 0.0
    %1442 = vmatpush1.msra.mxu0 0.0
    %1443 = vmatprep.subr.mxu0 0.0
    %1444 = vmatpush1.msra.mxu0 0.0
    %1445 = vmatprep.subr.mxu0 0.0
    %1446 = vmatpush1.msra.mxu0 0.0
    %1447 = vmatprep.subr.mxu0 0.0
    %1448 = vmatpush1.msra.mxu0 0.0
    %1449 = vmatprep.subr.mxu0 0.0
    %1450 = vmatpush1.msra.mxu0 0.0
    %1451 = vmatprep.subr.mxu0 0.0
    %1452 = vmatpush1.msra.mxu0 0.0
    %1453 = vmatprep.mubr.f32.mxu0 0.0
    %1454 = vmatmul.mubr.f32.gmra.mrb[0].mxu0 %v1387
    %v1455 = vpop.f32.mrb[0].mxu0
    %v1456 = vadd.f32 0.0, %v1455
    %v1457 = vpop.f32.mrb[0].mxu0
    %1458 = vdwg.mxu0
    %1459 = vrot.lane.b32.xlu0 %v144, 40
    %v1460 = vpop.permute.xlu0 %1459
    %v1463 = vsel %vm159, %v1372, 0
    %1465 = vmatprep.subr.mxu0 0.0
    %1466 = vmatpush1.msra.mxu0 %v1460
    %1467 = vmatprep.subr.mxu0 0.0
    %1468 = vmatpush1.msra.mxu0 0.0
    %1469 = vmatprep.subr.mxu0 0.0
    %1470 = vmatpush1.msra.mxu0 0.0
    %1471 = vmatprep.subr.mxu0 0.0
    %1472 = vmatpush1.msra.mxu0 0.0
    %1473 = vmatprep.subr.mxu0 0.0
    %1474 = vmatpush1.msra.mxu0 0.0
    %1475 = vmatprep.subr.mxu0 0.0
    %1476 = vmatpush1.msra.mxu0 0.0
    %1477 = vmatprep.subr.mxu0 0.0
    %1478 = vmatpush1.msra.mxu0 0.0
    %1479 = vmatprep.subr.mxu0 0.0
    %1480 = vmatpush1.msra.mxu0 0.0
    %1481 = vmatprep.subr.mxu0 0.0
    %1482 = vmatpush1.msra.mxu0 0.0
    %1483 = vmatprep.subr.mxu0 0.0
    %1484 = vmatpush1.msra.mxu0 0.0
    %1485 = vmatprep.subr.mxu0 0.0
    %1486 = vmatpush1.msra.mxu0 0.0
    %1487 = vmatprep.subr.mxu0 0.0
    %1488 = vmatpush1.msra.mxu0 0.0
    %1489 = vmatprep.subr.mxu0 0.0
    %1490 = vmatpush1.msra.mxu0 0.0
    %1491 = vmatprep.subr.mxu0 0.0
    %1492 = vmatpush1.msra.mxu0 0.0
    %1493 = vmatprep.subr.mxu0 0.0
    %1494 = vmatpush1.msra.mxu0 0.0
    %1495 = vmatprep.subr.mxu0 0.0
    %1496 = vmatpush1.msra.mxu0 0.0
    %1497 = vmatprep.subr.mxu0 0.0
    %1498 = vmatpush1.msra.mxu0 0.0
    %1499 = vmatprep.subr.mxu0 0.0
    %1500 = vmatpush1.msra.mxu0 0.0
    %1501 = vmatprep.subr.mxu0 0.0
    %1502 = vmatpush1.msra.mxu0 0.0
    %1503 = vmatprep.subr.mxu0 0.0
    %1504 = vmatpush1.msra.mxu0 0.0
    %1505 = vmatprep.subr.mxu0 0.0
    %1506 = vmatpush1.msra.mxu0 0.0
    %1507 = vmatprep.subr.mxu0 0.0
    %1508 = vmatpush1.msra.mxu0 0.0
    %1509 = vmatprep.subr.mxu0 0.0
    %1510 = vmatpush1.msra.mxu0 0.0
    %1511 = vmatprep.subr.mxu0 0.0
    %1512 = vmatpush1.msra.mxu0 0.0
    %1513 = vmatprep.subr.mxu0 0.0
    %1514 = vmatpush1.msra.mxu0 0.0
    %1515 = vmatprep.subr.mxu0 0.0
    %1516 = vmatpush1.msra.mxu0 0.0
    %1517 = vmatprep.subr.mxu0 0.0
    %1518 = vmatpush1.msra.mxu0 0.0
    %1519 = vmatprep.subr.mxu0 0.0
    %1520 = vmatpush1.msra.mxu0 0.0
    %1521 = vmatprep.subr.mxu0 0.0
    %1522 = vmatpush1.msra.mxu0 0.0
    %1523 = vmatprep.subr.mxu0 0.0
    %1524 = vmatpush1.msra.mxu0 0.0
    %1525 = vmatprep.subr.mxu0 0.0
    %1526 = vmatpush1.msra.mxu0 0.0
    %1527 = vmatprep.subr.mxu0 0.0
    %1528 = vmatpush1.msra.mxu0 0.0
    %1529 = vmatprep.mubr.f32.mxu0 0.0
    %1530 = vmatmul.mubr.f32.gmra.mrb[0].mxu0 %v1463
    %v1531 = vpop.f32.mrb[0].mxu0
    %v1532 = vadd.f32 0.0, %v1531
    %v1533 = vpop.f32.mrb[0].mxu0
    %1534 = vdwg.mxu0
    %v1535 = vadd.f32 %v1373, %v1456
    %v1536 = vadd.f32 %v1374, %v1532
    %v1537 = vrcp.pop %v1381
    %v1538 = vrcp.pop %v1382
    %v1539 = vmul.f32 %v1535, %v1537
    %v1540 = vmul.f32 %v1536, %v1538
    %1543 = vrot.lane.b32.xlu0 %v847, 8
    %v1544 = vpop.permute.xlu0 %1543
    %1545 = vrot.lane.b32.xlu0 %v848, 8
    %v1546 = vpop.permute.xlu0 %1545
    %1551 = vrot.lane.b32.xlu0 %v1193, 16
    %v1552 = vpop.permute.xlu0 %1551
    %1553 = vrot.lane.b32.xlu0 %v1194, 16
    %v1554 = vpop.permute.xlu0 %1553
    %1559 = vrot.lane.b32.xlu0 %v1539, 24
    %v1560 = vpop.permute.xlu0 %1559
    %1561 = vrot.lane.b32.xlu0 %v1540, 24
    %v1562 = vpop.permute.xlu0 %1561
    %v1565 = vsel %vm159, %v501, %v1544
    %v1566 = vsel %vm159, %v502, %v1546
    %vm1567 = vcmask 130048
    %v1568 = vsel %vm1567, %v1565, %v1552
    %v1569 = vsel %vm1567, %v1566, %v1554
    %vm1570 = vcmask 195584
    %v1571 = vsel %vm1570, %v1568, %v1560
    %v1572 = vsel %vm1570, %v1569, %v1562
    %v1573 = vld [vmem:[%s3] sm:$0x1]
    %v1575 = vlaneseq
    %v1576 = vshrl.u32 %v1575, 7
    %v1577 = vsub.s32 0, %v1576
    %v1578 = vrot.slane %v1573, %v1577
    %v1581 = vsel %vm65, %v1571, 0
    %v1584 = vsel %vm65, %v1572, 0
    %1586 = vmatprep.subr.mxu0 0.0
    %1587 = vmatpush1.msra.mxu0 %v152
    %1588 = vmatprep.subr.mxu0 0.0
    %1589 = vmatpush1.msra.mxu0 %v153
    %1590 = vmatprep.subr.mxu0 0.0
    %1591 = vmatpush1.msra.mxu0 %v154
    %1592 = vmatprep.subr.mxu0 0.0
    %1593 = vmatpush1.msra.mxu0 %v155
    %1594 = vmatprep.subr.mxu0 0.0
    %1595 = vmatpush1.msra.mxu0 0.0
    %1596 = vmatprep.subr.mxu0 0.0
    %1597 = vmatpush1.msra.mxu0 0.0
    %1598 = vmatprep.subr.mxu0 0.0
    %1599 = vmatpush1.msra.mxu0 0.0
    %1600 = vmatprep.subr.mxu0 0.0
    %1601 = vmatpush1.msra.mxu0 0.0
    %1602 = vmatprep.subr.mxu0 0.0
    %1603 = vmatpush1.msra.mxu0 0.0
    %1604 = vmatprep.subr.mxu0 0.0
    %1605 = vmatpush1.msra.mxu0 0.0
    %1606 = vmatprep.subr.mxu0 0.0
    %1607 = vmatpush1.msra.mxu0 0.0
    %1608 = vmatprep.subr.mxu0 0.0
    %1609 = vmatpush1.msra.mxu0 0.0
    %1610 = vmatprep.subr.mxu0 0.0
    %1611 = vmatpush1.msra.mxu0 0.0
    %1612 = vmatprep.subr.mxu0 0.0
    %1613 = vmatpush1.msra.mxu0 0.0
    %1614 = vmatprep.subr.mxu0 0.0
    %1615 = vmatpush1.msra.mxu0 0.0
    %1616 = vmatprep.subr.mxu0 0.0
    %1617 = vmatpush1.msra.mxu0 0.0
    %1618 = vmatprep.subr.mxu0 0.0
    %1619 = vmatpush1.msra.mxu0 0.0
    %1620 = vmatprep.subr.mxu0 0.0
    %1621 = vmatpush1.msra.mxu0 0.0
    %1622 = vmatprep.subr.mxu0 0.0
    %1623 = vmatpush1.msra.mxu0 0.0
    %1624 = vmatprep.subr.mxu0 0.0
    %1625 = vmatpush1.msra.mxu0 0.0
    %1626 = vmatprep.subr.mxu0 0.0
    %1627 = vmatpush1.msra.mxu0 0.0
    %1628 = vmatprep.subr.mxu0 0.0
    %1629 = vmatpush1.msra.mxu0 0.0
    %1630 = vmatprep.subr.mxu0 0.0
    %1631 = vmatpush1.msra.mxu0 0.0
    %1632 = vmatprep.subr.mxu0 0.0
    %1633 = vmatpush1.msra.mxu0 0.0
    %1634 = vmatprep.subr.mxu0 0.0
    %1635 = vmatpush1.msra.mxu0 0.0
    %1636 = vmatprep.subr.mxu0 0.0
    %1637 = vmatpush1.msra.mxu0 0.0
    %1638 = vmatprep.subr.mxu0 0.0
    %1639 = vmatpush1.msra.mxu0 0.0
    %1640 = vmatprep.subr.mxu0 0.0
    %1641 = vmatpush1.msra.mxu0 0.0
    %1642 = vmatprep.subr.mxu0 0.0
    %1643 = vmatpush1.msra.mxu0 0.0
    %1644 = vmatprep.subr.mxu0 0.0
    %1645 = vmatpush1.msra.mxu0 0.0
    %1646 = vmatprep.subr.mxu0 0.0
    %1647 = vmatpush1.msra.mxu0 0.0
    %1648 = vmatprep.subr.mxu0 0.0
    %1649 = vmatpush1.msra.mxu0 0.0
    %1650 = vmatprep.mubr.f32.mxu0 0.0
    %1651 = vmatmul.mubr.f32.gmra.mrb[0].mxu0 %v1581
    %v1652 = vpop.f32.mrb[0].mxu0
    %v1653 = vadd.f32 %v1578, %v1652
    %v1654 = vpop.f32.mrb[0].mxu0
    %1655 = vmatprep.mubr.f32.mxu0 0.0
    %1656 = vmatmul.mubr.f32.gmra.mrb[0].mxu0 %v1584
    %v1657 = vpop.f32.mrb[0].mxu0
    %v1658 = vadd.f32 %v1578, %v1657
    %v1659 = vpop.f32.mrb[0].mxu0
    %1660 = vdwg.mxu0
    %1661 = vst.msk [vmem:[#allocation8] sm:$0xff] %vm65, %v1653
    %1662 = vst.msk [vmem:[#allocation8 + $0x8] sm:$0xff] %vm65, %v1658
    // Predicated region
    $region30: #{tpu_custom_call.1} parent=1 // pred_check
      _
    $region31: #{tpu_custom_call.1} parent=1 // pred_check_branch
      %1664 = sbr.rel (0) target = $region33
    $region32: #{tpu_custom_call.1} parent=1 // pred_region
      %s1666 = ssub.s32 256, 256
      %1667 = vsyncadd [#allocation4], %s1666
      %s1668 = sshll.u32 [#allocation8], 4
      %s1669 = int_to_ptr.vmem [resolvable:$true] %s1668
      %1674 = dma.vmem_to_hbm [thread:$0]  %s1669, 256, %s4, [#allocation4], 128, 128, 8
    $region33: #{tpu_custom_call.1} parent=1 // pred_fallthru
      _
    // Predicated region
    $region34: #{tpu_custom_call.1} parent=1 // pred_check
      _
    $region35: #{tpu_custom_call.1} parent=1 // pred_check_branch
      %1676 = sbr.rel (0) target = $region37
    $region36: #{tpu_custom_call.1} parent=1 // pred_region
      %1677 = dma.done [#allocation4], 256
    $region37: #{tpu_custom_call.1} parent=1 // pred_fallthru
      _
    %1678 = vsyncpa [#allocation3], 1
    %1679 = vsyncpa [#allocation6], 1
    %1680 = vsyncpa [#allocation4], 1

</llo_original>
